<compile_context>
chip_gen: v7x
topology: tpu7x:2x2x1
jax: 0.10.0
libtpu: 0.0.40
codegen_flags: <defaults>
</compile_context>

<pallas_src>
import functools

import jax
import jax.numpy as jnp
from jax.experimental import pallas as pl
from jax.experimental.pallas import tpu as pltpu


# ----------------------------------------------------------------------------
# Fused kernel: all LSTM layers + final FC in one invocation.
# Gate order matches PyTorch: [i, f, g, o].
# refs = [w_ih_0, w_hh_0, b_0, ..., w_ih_{L-1}, w_hh_{L-1}, b_{L-1},
#         fc_w, fc_b, out_ref, h_seq_scratch]
# ----------------------------------------------------------------------------
def _fused_lstm_fc_kernel(x_ref, *refs, num_layers, hidden_dim, compute_dtype):
    h_seq_ref = refs[-1]          # VMEM scratch (T*B, H) f32, time-major rows (row = t*B + b)
    out_ref = refs[-2]
    fc_b_ref = refs[-3]
    fc_w_ref = refs[-4]
    layer_refs = refs[:-4]

    B, T, D = x_ref.shape
    H = hidden_dim

    h = None
    for l in range(num_layers):
        w_ih_ref = layer_refs[3 * l + 0]
        w_hh_ref = layer_refs[3 * l + 1]
        b_ref = layer_refs[3 * l + 2]

        # ---- Layer input as a flat (rows, D_in) bf16 slab -------------------------------
        if l == 0:
            # batch_first block consumed directly: free reshape, rows are batch-major (b*T + t).
            x_all = x_ref[...].reshape(B * T, D)           # already compute_dtype from HBM
            rows_time_major = False
        else:
            # Previous layer's hidden sequence from VMEM scratch, time-major rows (t*B + b).
            x_all = h_seq_ref[...].astype(compute_dtype)
            rows_time_major = True

        # ---- Hoisted input projection: one big MXU GEMM for the whole sequence ----------
        xproj = (
            jnp.dot(x_all, w_ih_ref[...], preferred_element_type=jnp.float32)
            + b_ref[...]                                   # (rows, 4H), f32 accumulation
        )
        if not rows_time_major:
            xproj_bt = xproj.reshape(B, T, 4 * H)          # batch-major view for layer 0

        w_hh = w_hh_ref[...]                               # load recurrent weights once (bf16)
        h = jnp.zeros((B, H), jnp.float32)
        c = jnp.zeros((B, H), jnp.float32)                 # cell state stays f32

        # ---- Sequential recurrence: statically unrolled, only h @ W_hh^T inside ---------
        for t in range(T):
            if rows_time_major:
                xp_t = xproj[t * B:(t + 1) * B, :]         # rows [t*B, (t+1)*B)
            else:
                xp_t = xproj_bt[:, t, :]                   # (B, 4H)

            gates = xp_t + jnp.dot(
                h.astype(compute_dtype), w_hh, preferred_element_type=jnp.float32
            )                                              # (B, 4H), f32

            # Two full-vreg EUP passes, then cheap H-wide slices (i, f, o from sig; g from th).
            sig = jax.nn.sigmoid(gates)                    # (B, 4H)
            th = jnp.tanh(gates)                           # (B, 4H)
            i_g = sig[:, 0 * H:1 * H]
            f_g = sig[:, 1 * H:2 * H]
            g_g = th[:, 2 * H:3 * H]
            o_g = sig[:, 3 * H:4 * H]

            c = f_g * c + i_g * g_g
            h = o_g * jnp.tanh(c)

            if l < num_layers - 1:                         # last layer only needs h_T
                h_seq_ref[t * B:(t + 1) * B, :] = h        # static row slice into VMEM scratch

    # ---- Fused FC on the last timestep of the last layer (== lstm_out[:, -1, :]) --------
    out_ref[...] = (
        jnp.dot(h.astype(compute_dtype), fc_w_ref[...], preferred_element_type=jnp.float32)
        + fc_b_ref[...]
    )


def lstm_model_forward(x_btd, params, *, compute_dtype=jnp.bfloat16):
    """x_btd: (B, T, input_dim) batch_first, like the PyTorch module. Returns (B, output_dim)."""
    B, T, D = x_btd.shape
    layers = params["layers"]
    num_layers = len(layers)
    H = layers[0]["w_hh_t"].shape[0]
    O = params["fc_w_t"].shape[1]

    kernel = functools.partial(
        _fused_lstm_fc_kernel,
        num_layers=num_layers,
        hidden_dim=H,
        compute_dtype=compute_dtype,
    )

    # Sequence input goes to the kernel already in compute_dtype -> half the HBM->VMEM bytes.
    operands = [x_btd.astype(compute_dtype)]
    for layer in layers:
        operands += [
            layer["w_ih_t"].astype(compute_dtype),         # (D_in, 4H) bf16 MXU operand
            layer["w_hh_t"].astype(compute_dtype),         # (H, 4H)   bf16 MXU operand
            layer["bias"].astype(jnp.float32),             # (1, 4H)   f32 (b_ih + b_hh)
        ]
    operands += [
        params["fc_w_t"].astype(compute_dtype),            # (H, O)
        params["fc_b"].astype(jnp.float32),                # (1, O)
    ]

    # Resident-footprint estimate: operands + output + hidden-sequence scratch + the per-layer
    # (rows, 4H) f32 xproj value, with generous headroom; clamp to [16 MiB, 64 MiB] so the same
    # setting is valid on v5e / v6e / v7x.
    operand_bytes = sum(int(o.size) * o.dtype.itemsize for o in operands)
    scratch_bytes = T * B * H * 4
    xproj_bytes = B * T * 4 * H * 4
    est = operand_bytes + scratch_bytes + xproj_bytes + B * O * 4
    vmem_limit = int(min(64 << 20, max(16 << 20, 4 * est)))

    vmem = pl.BlockSpec(memory_space=pltpu.MemorySpace.VMEM)   # whole array, single-buffered
    return pl.pallas_call(
        kernel,
        out_shape=jax.ShapeDtypeStruct((B, O), jnp.float32),
        in_specs=[vmem] * len(operands),
        out_specs=vmem,
        scratch_shapes=[pltpu.VMEM((T * B, H), jnp.float32)],  # inter-layer hidden sequence
        compiler_params=pltpu.CompilerParams(vmem_limit_bytes=vmem_limit),
    )(*operands)


# ----------------------------------------------------------------------------
# Parameter init matching PyTorch shapes: U(-1/sqrt(H), 1/sqrt(H)).
# ----------------------------------------------------------------------------
def init_params(key, input_dim, hidden_dim, num_layers, output_dim):
    k = 1.0 / jnp.sqrt(hidden_dim)
    params = {"layers": []}
    for l in range(num_layers):
        d_in = input_dim if l == 0 else hidden_dim
        key, k1, k2, k3, k4 = jax.random.split(key, 5)
        w_ih = jax.random.uniform(k1, (4 * hidden_dim, d_in), jnp.float32, -k, k)
        w_hh = jax.random.uniform(k2, (4 * hidden_dim, hidden_dim), jnp.float32, -k, k)
        b_ih = jax.random.uniform(k3, (4 * hidden_dim,), jnp.float32, -k, k)
        b_hh = jax.random.uniform(k4, (4 * hidden_dim,), jnp.float32, -k, k)
        params["layers"].append({
            "w_ih_t": w_ih.T,                              # (d_in, 4H)
            "w_hh_t": w_hh.T,                              # (H, 4H)
            "bias": (b_ih + b_hh).reshape(1, 4 * hidden_dim),
        })
    key, k5, k6 = jax.random.split(key, 3)
    fc_w = jax.random.uniform(k5, (output_dim, hidden_dim), jnp.float32, -k, k)
    fc_b = jax.random.uniform(k6, (output_dim,), jnp.float32, -k, k)
    params["fc_w_t"] = fc_w.T                              # (H, O)
    params["fc_b"] = fc_b.reshape(1, output_dim)
    return params


# ----------------------------------------------------------------------------
# Pure-JAX reference with the same precision policy (bf16 MXU operands, f32 accum/state).
# ----------------------------------------------------------------------------
def reference_forward(x_btd, params, compute_dtype=jnp.bfloat16):
    B, T, _ = x_btd.shape
    layer_in = x_btd.astype(jnp.float32)                   # (B, T, D)
    h = None
    for layer in params["layers"]:
        H = layer["w_hh_t"].shape[0]
        w_ih = layer["w_ih_t"].astype(compute_dtype)
        w_hh = layer["w_hh_t"].astype(compute_dtype)
        b = layer["bias"].astype(jnp.float32)
        h = jnp.zeros((B, H), jnp.float32)
        c = jnp.zeros((B, H), jnp.float32)
        outs = []
        for t in range(T):
            x_t = layer_in[:, t, :].astype(compute_dtype)
            gates = (
                jnp.dot(x_t, w_ih, preferred_element_type=jnp.float32) + b
                + jnp.dot(h.astype(compute_dtype), w_hh, preferred_element_type=jnp.float32)
            )
            i_g = jax.nn.sigmoid(gates[:, 0 * H:1 * H])
            f_g = jax.nn.sigmoid(gates[:, 1 * H:2 * H])
            g_g = jnp.tanh(gates[:, 2 * H:3 * H])
            o_g = jax.nn.sigmoid(gates[:, 3 * H:4 * H])
            c = f_g * c + i_g * g_g
            h = o_g * jnp.tanh(c)
            outs.append(h)
        layer_in = jnp.stack(outs, axis=1)                 # (B, T, H)
    return (
        jnp.dot(h.astype(compute_dtype), params["fc_w_t"].astype(compute_dtype),
                preferred_element_type=jnp.float32)
        + params["fc_b"].astype(jnp.float32)
    )


if __name__ == "__main__":
    INPUT_DIM, HIDDEN_DIM, NUM_LAYERS, OUTPUT_DIM = 16, 32, 2, 4
    BATCH, SEQ = 2, 8

    key = jax.random.PRNGKey(0)
    key, xk = jax.random.split(key)
    x = jax.random.normal(xk, (BATCH, SEQ, INPUT_DIM), jnp.float32)

    params = init_params(key, INPUT_DIM, HIDDEN_DIM, NUM_LAYERS, OUTPUT_DIM)

    out = jax.block_until_ready(jax.jit(lstm_model_forward)(x, params))
    ref = jax.block_until_ready(jax.jit(reference_forward)(x, params))

    assert out.shape == (BATCH, OUTPUT_DIM), out.shape
    assert jnp.allclose(out, ref, atol=1e-3, rtol=1e-3), (out, ref)

    print("KERNEL_OK")
</pallas_src>

<mosaic_0001>
module attributes {stable_mosaic.version = 11 : i64} {
  func.func @_fused_lstm_fc_kernel(%arg0: memref<2x8x16xbf16, #tpu.memory_space<vmem>>, %arg1: memref<16x128xbf16, #tpu.memory_space<vmem>>, %arg2: memref<32x128xbf16, #tpu.memory_space<vmem>>, %arg3: memref<1x128xf32, #tpu.memory_space<vmem>>, %arg4: memref<32x128xbf16, #tpu.memory_space<vmem>>, %arg5: memref<32x128xbf16, #tpu.memory_space<vmem>>, %arg6: memref<1x128xf32, #tpu.memory_space<vmem>>, %arg7: memref<32x4xbf16, #tpu.memory_space<vmem>>, %arg8: memref<1x4xf32, #tpu.memory_space<vmem>>, %arg9: memref<2x4xf32, #tpu.memory_space<vmem>>, %arg10: memref<16x32xf32, #tpu.memory_space<vmem>>) attributes {dimension_semantics = [], scalar_prefetch = 0 : i64, scratch_operands = 1 : i64, tpu.core_type = #tpu.core_type<tc>} {
    %c0 = arith.constant 0 : index
    %c0_0 = arith.constant 0 : index
    %c0_1 = arith.constant 0 : index
    %0 = vector.load %arg0[%c0, %c0_0, %c0_1] : memref<2x8x16xbf16, #tpu.memory_space<vmem>>, vector<2x8x16xbf16>
    %1 = vector.shape_cast %0 : vector<2x8x16xbf16> to vector<16x16xbf16>
    %c0_2 = arith.constant 0 : index
    %c0_3 = arith.constant 0 : index
    %2 = vector.load %arg1[%c0_2, %c0_3] : memref<16x128xbf16, #tpu.memory_space<vmem>>, vector<16x128xbf16>
    %cst = arith.constant dense<0.000000e+00> : vector<16x128xf32>
    %3 = tpu.matmul %1, %2, %cst {dimension_numbers = #tpu.dot_dimension_numbers<[1], [0], [0], [1], [0, 0, 1, 1], [], []>} : vector<16x16xbf16>, vector<16x128xbf16>, vector<16x128xf32> -> vector<16x128xf32>
    %c0_4 = arith.constant 0 : index
    %c0_5 = arith.constant 0 : index
    %4 = vector.load %arg3[%c0_4, %c0_5] : memref<1x128xf32, #tpu.memory_space<vmem>>, vector<1x128xf32>
    %5 = vector.broadcast %4 : vector<1x128xf32> to vector<16x128xf32>
    %6 = arith.addf %3, %5 : vector<16x128xf32>
    %7 = vector.shape_cast %6 : vector<16x128xf32> to vector<2x8x128xf32>
    %c0_6 = arith.constant 0 : index
    %c0_7 = arith.constant 0 : index
    %8 = vector.load %arg2[%c0_6, %c0_7] : memref<32x128xbf16, #tpu.memory_space<vmem>>, vector<32x128xbf16>
    %cst_8 = arith.constant 0.000000e+00 : f32
    %9 = vector.broadcast %cst_8 : f32 to vector<2x32xf32>
    %cst_9 = arith.constant 0.000000e+00 : f32
    %10 = vector.broadcast %cst_9 : f32 to vector<2x32xf32>
    %11 = vector.extract_strided_slice %7 {offsets = [0, 0, 0], sizes = [2, 1, 128], strides = [1, 1, 1]} : vector<2x8x128xf32> to vector<2x1x128xf32>
    %12 = vector.shape_cast %11 : vector<2x1x128xf32> to vector<2x128xf32>
    %13 = arith.truncf %9 : vector<2x32xf32> to vector<2x32xbf16>
    %cst_10 = arith.constant dense<0.000000e+00> : vector<2x128xf32>
    %14 = tpu.matmul %13, %8, %cst_10 {dimension_numbers = #tpu.dot_dimension_numbers<[1], [0], [0], [1], [0, 0, 1, 1], [], []>} : vector<2x32xbf16>, vector<32x128xbf16>, vector<2x128xf32> -> vector<2x128xf32>
    %15 = arith.addf %12, %14 : vector<2x128xf32>
    %16 = arith.negf %15 : vector<2x128xf32>
    %17 = math.exp %16 : vector<2x128xf32>
    %cst_11 = arith.constant 1.000000e+00 : f32
    %18 = vector.broadcast %cst_11 : f32 to vector<2x128xf32>
    %19 = arith.addf %18, %17 : vector<2x128xf32>
    %20 = arith.divf %18, %19 : vector<2x128xf32>
    %21 = math.tanh %15 : vector<2x128xf32>
    %22 = vector.extract_strided_slice %20 {offsets = [0, 0], sizes = [2, 32], strides = [1, 1]} : vector<2x128xf32> to vector<2x32xf32>
    %23 = vector.extract_strided_slice %20 {offsets = [0, 32], sizes = [2, 32], strides = [1, 1]} : vector<2x128xf32> to vector<2x32xf32>
    %24 = vector.extract_strided_slice %21 {offsets = [0, 64], sizes = [2, 32], strides = [1, 1]} : vector<2x128xf32> to vector<2x32xf32>
    %25 = vector.extract_strided_slice %20 {offsets = [0, 96], sizes = [2, 32], strides = [1, 1]} : vector<2x128xf32> to vector<2x32xf32>
    %26 = arith.mulf %23, %10 : vector<2x32xf32>
    %27 = arith.mulf %22, %24 : vector<2x32xf32>
    %28 = arith.addf %26, %27 : vector<2x32xf32>
    %29 = math.tanh %28 : vector<2x32xf32>
    %30 = arith.mulf %25, %29 : vector<2x32xf32>
    %c0_12 = arith.constant 0 : index
    %c0_13 = arith.constant 0 : index
    %31 = vector.load %arg10[%c0_12, %c0_13] : memref<16x32xf32, #tpu.memory_space<vmem>>, vector<2x32xf32>
    tpu.vector_store %arg10[%c0_12, %c0_13], %30 {strides = array<i32>} : memref<16x32xf32, #tpu.memory_space<vmem>>, vector<2x32xf32>,
    %32 = vector.extract_strided_slice %7 {offsets = [0, 1, 0], sizes = [2, 1, 128], strides = [1, 1, 1]} : vector<2x8x128xf32> to vector<2x1x128xf32>
    %33 = vector.shape_cast %32 : vector<2x1x128xf32> to vector<2x128xf32>
    %34 = arith.truncf %30 : vector<2x32xf32> to vector<2x32xbf16>
    %cst_14 = arith.constant dense<0.000000e+00> : vector<2x128xf32>
    %35 = tpu.matmul %34, %8, %cst_14 {dimension_numbers = #tpu.dot_dimension_numbers<[1], [0], [0], [1], [0, 0, 1, 1], [], []>} : vector<2x32xbf16>, vector<32x128xbf16>, vector<2x128xf32> -> vector<2x128xf32>
    %36 = arith.addf %33, %35 : vector<2x128xf32>
    %37 = arith.negf %36 : vector<2x128xf32>
    %38 = math.exp %37 : vector<2x128xf32>
    %cst_15 = arith.constant 1.000000e+00 : f32
    %39 = vector.broadcast %cst_15 : f32 to vector<2x128xf32>
    %40 = arith.addf %39, %38 : vector<2x128xf32>
    %41 = arith.divf %39, %40 : vector<2x128xf32>
    %42 = math.tanh %36 : vector<2x128xf32>
    %43 = vector.extract_strided_slice %41 {offsets = [0, 0], sizes = [2, 32], strides = [1, 1]} : vector<2x128xf32> to vector<2x32xf32>
    %44 = vector.extract_strided_slice %41 {offsets = [0, 32], sizes = [2, 32], strides = [1, 1]} : vector<2x128xf32> to vector<2x32xf32>
    %45 = vector.extract_strided_slice %42 {offsets = [0, 64], sizes = [2, 32], strides = [1, 1]} : vector<2x128xf32> to vector<2x32xf32>
    %46 = vector.extract_strided_slice %41 {offsets = [0, 96], sizes = [2, 32], strides = [1, 1]} : vector<2x128xf32> to vector<2x32xf32>
    %47 = arith.mulf %44, %28 : vector<2x32xf32>
    %48 = arith.mulf %43, %45 : vector<2x32xf32>
    %49 = arith.addf %47, %48 : vector<2x32xf32>
    %50 = math.tanh %49 : vector<2x32xf32>
    %51 = arith.mulf %46, %50 : vector<2x32xf32>
    %c2 = arith.constant 2 : index
    %c0_16 = arith.constant 0 : index
    %52 = vector.load %arg10[%c2, %c0_16] : memref<16x32xf32, #tpu.memory_space<vmem>>, vector<2x32xf32>
    tpu.vector_store %arg10[%c2, %c0_16], %51 {strides = array<i32>} : memref<16x32xf32, #tpu.memory_space<vmem>>, vector<2x32xf32>,
    %53 = vector.extract_strided_slice %7 {offsets = [0, 2, 0], sizes = [2, 1, 128], strides = [1, 1, 1]} : vector<2x8x128xf32> to vector<2x1x128xf32>
    %54 = vector.shape_cast %53 : vector<2x1x128xf32> to vector<2x128xf32>
    %55 = arith.truncf %51 : vector<2x32xf32> to vector<2x32xbf16>
    %cst_17 = arith.constant dense<0.000000e+00> : vector<2x128xf32>
    %56 = tpu.matmul %55, %8, %cst_17 {dimension_numbers = #tpu.dot_dimension_numbers<[1], [0], [0], [1], [0, 0, 1, 1], [], []>} : vector<2x32xbf16>, vector<32x128xbf16>, vector<2x128xf32> -> vector<2x128xf32>
    %57 = arith.addf %54, %56 : vector<2x128xf32>
    %58 = arith.negf %57 : vector<2x128xf32>
    %59 = math.exp %58 : vector<2x128xf32>
    %cst_18 = arith.constant 1.000000e+00 : f32
    %60 = vector.broadcast %cst_18 : f32 to vector<2x128xf32>
    %61 = arith.addf %60, %59 : vector<2x128xf32>
    %62 = arith.divf %60, %61 : vector<2x128xf32>
    %63 = math.tanh %57 : vector<2x128xf32>
    %64 = vector.extract_strided_slice %62 {offsets = [0, 0], sizes = [2, 32], strides = [1, 1]} : vector<2x128xf32> to vector<2x32xf32>
    %65 = vector.extract_strided_slice %62 {offsets = [0, 32], sizes = [2, 32], strides = [1, 1]} : vector<2x128xf32> to vector<2x32xf32>
    %66 = vector.extract_strided_slice %63 {offsets = [0, 64], sizes = [2, 32], strides = [1, 1]} : vector<2x128xf32> to vector<2x32xf32>
    %67 = vector.extract_strided_slice %62 {offsets = [0, 96], sizes = [2, 32], strides = [1, 1]} : vector<2x128xf32> to vector<2x32xf32>
    %68 = arith.mulf %65, %49 : vector<2x32xf32>
    %69 = arith.mulf %64, %66 : vector<2x32xf32>
    %70 = arith.addf %68, %69 : vector<2x32xf32>
    %71 = math.tanh %70 : vector<2x32xf32>
    %72 = arith.mulf %67, %71 : vector<2x32xf32>
    %c4 = arith.constant 4 : index
    %c0_19 = arith.constant 0 : index
    %73 = vector.load %arg10[%c4, %c0_19] : memref<16x32xf32, #tpu.memory_space<vmem>>, vector<2x32xf32>
    tpu.vector_store %arg10[%c4, %c0_19], %72 {strides = array<i32>} : memref<16x32xf32, #tpu.memory_space<vmem>>, vector<2x32xf32>,
    %74 = vector.extract_strided_slice %7 {offsets = [0, 3, 0], sizes = [2, 1, 128], strides = [1, 1, 1]} : vector<2x8x128xf32> to vector<2x1x128xf32>
    %75 = vector.shape_cast %74 : vector<2x1x128xf32> to vector<2x128xf32>
    %76 = arith.truncf %72 : vector<2x32xf32> to vector<2x32xbf16>
    %cst_20 = arith.constant dense<0.000000e+00> : vector<2x128xf32>
    %77 = tpu.matmul %76, %8, %cst_20 {dimension_numbers = #tpu.dot_dimension_numbers<[1], [0], [0], [1], [0, 0, 1, 1], [], []>} : vector<2x32xbf16>, vector<32x128xbf16>, vector<2x128xf32> -> vector<2x128xf32>
    %78 = arith.addf %75, %77 : vector<2x128xf32>
    %79 = arith.negf %78 : vector<2x128xf32>
    %80 = math.exp %79 : vector<2x128xf32>
    %cst_21 = arith.constant 1.000000e+00 : f32
    %81 = vector.broadcast %cst_21 : f32 to vector<2x128xf32>
    %82 = arith.addf %81, %80 : vector<2x128xf32>
    %83 = arith.divf %81, %82 : vector<2x128xf32>
    %84 = math.tanh %78 : vector<2x128xf32>
    %85 = vector.extract_strided_slice %83 {offsets = [0, 0], sizes = [2, 32], strides = [1, 1]} : vector<2x128xf32> to vector<2x32xf32>
    %86 = vector.extract_strided_slice %83 {offsets = [0, 32], sizes = [2, 32], strides = [1, 1]} : vector<2x128xf32> to vector<2x32xf32>
    %87 = vector.extract_strided_slice %84 {offsets = [0, 64], sizes = [2, 32], strides = [1, 1]} : vector<2x128xf32> to vector<2x32xf32>
    %88 = vector.extract_strided_slice %83 {offsets = [0, 96], sizes = [2, 32], strides = [1, 1]} : vector<2x128xf32> to vector<2x32xf32>
    %89 = arith.mulf %86, %70 : vector<2x32xf32>
    %90 = arith.mulf %85, %87 : vector<2x32xf32>
    %91 = arith.addf %89, %90 : vector<2x32xf32>
    %92 = math.tanh %91 : vector<2x32xf32>
    %93 = arith.mulf %88, %92 : vector<2x32xf32>
    %c6 = arith.constant 6 : index
    %c0_22 = arith.constant 0 : index
    %94 = vector.load %arg10[%c6, %c0_22] : memref<16x32xf32, #tpu.memory_space<vmem>>, vector<2x32xf32>
    tpu.vector_store %arg10[%c6, %c0_22], %93 {strides = array<i32>} : memref<16x32xf32, #tpu.memory_space<vmem>>, vector<2x32xf32>,
    %95 = vector.extract_strided_slice %7 {offsets = [0, 4, 0], sizes = [2, 1, 128], strides = [1, 1, 1]} : vector<2x8x128xf32> to vector<2x1x128xf32>
    %96 = vector.shape_cast %95 : vector<2x1x128xf32> to vector<2x128xf32>
    %97 = arith.truncf %93 : vector<2x32xf32> to vector<2x32xbf16>
    %cst_23 = arith.constant dense<0.000000e+00> : vector<2x128xf32>
    %98 = tpu.matmul %97, %8, %cst_23 {dimension_numbers = #tpu.dot_dimension_numbers<[1], [0], [0], [1], [0, 0, 1, 1], [], []>} : vector<2x32xbf16>, vector<32x128xbf16>, vector<2x128xf32> -> vector<2x128xf32>
    %99 = arith.addf %96, %98 : vector<2x128xf32>
    %100 = arith.negf %99 : vector<2x128xf32>
    %101 = math.exp %100 : vector<2x128xf32>
    %cst_24 = arith.constant 1.000000e+00 : f32
    %102 = vector.broadcast %cst_24 : f32 to vector<2x128xf32>
    %103 = arith.addf %102, %101 : vector<2x128xf32>
    %104 = arith.divf %102, %103 : vector<2x128xf32>
    %105 = math.tanh %99 : vector<2x128xf32>
    %106 = vector.extract_strided_slice %104 {offsets = [0, 0], sizes = [2, 32], strides = [1, 1]} : vector<2x128xf32> to vector<2x32xf32>
    %107 = vector.extract_strided_slice %104 {offsets = [0, 32], sizes = [2, 32], strides = [1, 1]} : vector<2x128xf32> to vector<2x32xf32>
    %108 = vector.extract_strided_slice %105 {offsets = [0, 64], sizes = [2, 32], strides = [1, 1]} : vector<2x128xf32> to vector<2x32xf32>
    %109 = vector.extract_strided_slice %104 {offsets = [0, 96], sizes = [2, 32], strides = [1, 1]} : vector<2x128xf32> to vector<2x32xf32>
    %110 = arith.mulf %107, %91 : vector<2x32xf32>
    %111 = arith.mulf %106, %108 : vector<2x32xf32>
    %112 = arith.addf %110, %111 : vector<2x32xf32>
    %113 = math.tanh %112 : vector<2x32xf32>
    %114 = arith.mulf %109, %113 : vector<2x32xf32>
    %c8 = arith.constant 8 : index
    %c0_25 = arith.constant 0 : index
    %115 = vector.load %arg10[%c8, %c0_25] : memref<16x32xf32, #tpu.memory_space<vmem>>, vector<2x32xf32>
    tpu.vector_store %arg10[%c8, %c0_25], %114 {strides = array<i32>} : memref<16x32xf32, #tpu.memory_space<vmem>>, vector<2x32xf32>,
    %116 = vector.extract_strided_slice %7 {offsets = [0, 5, 0], sizes = [2, 1, 128], strides = [1, 1, 1]} : vector<2x8x128xf32> to vector<2x1x128xf32>
    %117 = vector.shape_cast %116 : vector<2x1x128xf32> to vector<2x128xf32>
    %118 = arith.truncf %114 : vector<2x32xf32> to vector<2x32xbf16>
    %cst_26 = arith.constant dense<0.000000e+00> : vector<2x128xf32>
    %119 = tpu.matmul %118, %8, %cst_26 {dimension_numbers = #tpu.dot_dimension_numbers<[1], [0], [0], [1], [0, 0, 1, 1], [], []>} : vector<2x32xbf16>, vector<32x128xbf16>, vector<2x128xf32> -> vector<2x128xf32>
    %120 = arith.addf %117, %119 : vector<2x128xf32>
    %121 = arith.negf %120 : vector<2x128xf32>
    %122 = math.exp %121 : vector<2x128xf32>
    %cst_27 = arith.constant 1.000000e+00 : f32
    %123 = vector.broadcast %cst_27 : f32 to vector<2x128xf32>
    %124 = arith.addf %123, %122 : vector<2x128xf32>
    %125 = arith.divf %123, %124 : vector<2x128xf32>
    %126 = math.tanh %120 : vector<2x128xf32>
    %127 = vector.extract_strided_slice %125 {offsets = [0, 0], sizes = [2, 32], strides = [1, 1]} : vector<2x128xf32> to vector<2x32xf32>
    %128 = vector.extract_strided_slice %125 {offsets = [0, 32], sizes = [2, 32], strides = [1, 1]} : vector<2x128xf32> to vector<2x32xf32>
    %129 = vector.extract_strided_slice %126 {offsets = [0, 64], sizes = [2, 32], strides = [1, 1]} : vector<2x128xf32> to vector<2x32xf32>
    %130 = vector.extract_strided_slice %125 {offsets = [0, 96], sizes = [2, 32], strides = [1, 1]} : vector<2x128xf32> to vector<2x32xf32>
    %131 = arith.mulf %128, %112 : vector<2x32xf32>
    %132 = arith.mulf %127, %129 : vector<2x32xf32>
    %133 = arith.addf %131, %132 : vector<2x32xf32>
    %134 = math.tanh %133 : vector<2x32xf32>
    %135 = arith.mulf %130, %134 : vector<2x32xf32>
    %c10 = arith.constant 10 : index
    %c0_28 = arith.constant 0 : index
    %136 = vector.load %arg10[%c10, %c0_28] : memref<16x32xf32, #tpu.memory_space<vmem>>, vector<2x32xf32>
    tpu.vector_store %arg10[%c10, %c0_28], %135 {strides = array<i32>} : memref<16x32xf32, #tpu.memory_space<vmem>>, vector<2x32xf32>,
    %137 = vector.extract_strided_slice %7 {offsets = [0, 6, 0], sizes = [2, 1, 128], strides = [1, 1, 1]} : vector<2x8x128xf32> to vector<2x1x128xf32>
    %138 = vector.shape_cast %137 : vector<2x1x128xf32> to vector<2x128xf32>
    %139 = arith.truncf %135 : vector<2x32xf32> to vector<2x32xbf16>
    %cst_29 = arith.constant dense<0.000000e+00> : vector<2x128xf32>
    %140 = tpu.matmul %139, %8, %cst_29 {dimension_numbers = #tpu.dot_dimension_numbers<[1], [0], [0], [1], [0, 0, 1, 1], [], []>} : vector<2x32xbf16>, vector<32x128xbf16>, vector<2x128xf32> -> vector<2x128xf32>
    %141 = arith.addf %138, %140 : vector<2x128xf32>
    %142 = arith.negf %141 : vector<2x128xf32>
    %143 = math.exp %142 : vector<2x128xf32>
    %cst_30 = arith.constant 1.000000e+00 : f32
    %144 = vector.broadcast %cst_30 : f32 to vector<2x128xf32>
    %145 = arith.addf %144, %143 : vector<2x128xf32>
    %146 = arith.divf %144, %145 : vector<2x128xf32>
    %147 = math.tanh %141 : vector<2x128xf32>
    %148 = vector.extract_strided_slice %146 {offsets = [0, 0], sizes = [2, 32], strides = [1, 1]} : vector<2x128xf32> to vector<2x32xf32>
    %149 = vector.extract_strided_slice %146 {offsets = [0, 32], sizes = [2, 32], strides = [1, 1]} : vector<2x128xf32> to vector<2x32xf32>
    %150 = vector.extract_strided_slice %147 {offsets = [0, 64], sizes = [2, 32], strides = [1, 1]} : vector<2x128xf32> to vector<2x32xf32>
    %151 = vector.extract_strided_slice %146 {offsets = [0, 96], sizes = [2, 32], strides = [1, 1]} : vector<2x128xf32> to vector<2x32xf32>
    %152 = arith.mulf %149, %133 : vector<2x32xf32>
    %153 = arith.mulf %148, %150 : vector<2x32xf32>
    %154 = arith.addf %152, %153 : vector<2x32xf32>
    %155 = math.tanh %154 : vector<2x32xf32>
    %156 = arith.mulf %151, %155 : vector<2x32xf32>
    %c12 = arith.constant 12 : index
    %c0_31 = arith.constant 0 : index
    %157 = vector.load %arg10[%c12, %c0_31] : memref<16x32xf32, #tpu.memory_space<vmem>>, vector<2x32xf32>
    tpu.vector_store %arg10[%c12, %c0_31], %156 {strides = array<i32>} : memref<16x32xf32, #tpu.memory_space<vmem>>, vector<2x32xf32>,
    %158 = vector.extract_strided_slice %7 {offsets = [0, 7, 0], sizes = [2, 1, 128], strides = [1, 1, 1]} : vector<2x8x128xf32> to vector<2x1x128xf32>
    %159 = vector.shape_cast %158 : vector<2x1x128xf32> to vector<2x128xf32>
    %160 = arith.truncf %156 : vector<2x32xf32> to vector<2x32xbf16>
    %cst_32 = arith.constant dense<0.000000e+00> : vector<2x128xf32>
    %161 = tpu.matmul %160, %8, %cst_32 {dimension_numbers = #tpu.dot_dimension_numbers<[1], [0], [0], [1], [0, 0, 1, 1], [], []>} : vector<2x32xbf16>, vector<32x128xbf16>, vector<2x128xf32> -> vector<2x128xf32>
    %162 = arith.addf %159, %161 : vector<2x128xf32>
    %163 = arith.negf %162 : vector<2x128xf32>
    %164 = math.exp %163 : vector<2x128xf32>
    %cst_33 = arith.constant 1.000000e+00 : f32
    %165 = vector.broadcast %cst_33 : f32 to vector<2x128xf32>
    %166 = arith.addf %165, %164 : vector<2x128xf32>
    %167 = arith.divf %165, %166 : vector<2x128xf32>
    %168 = math.tanh %162 : vector<2x128xf32>
    %169 = vector.extract_strided_slice %167 {offsets = [0, 0], sizes = [2, 32], strides = [1, 1]} : vector<2x128xf32> to vector<2x32xf32>
    %170 = vector.extract_strided_slice %167 {offsets = [0, 32], sizes = [2, 32], strides = [1, 1]} : vector<2x128xf32> to vector<2x32xf32>
    %171 = vector.extract_strided_slice %168 {offsets = [0, 64], sizes = [2, 32], strides = [1, 1]} : vector<2x128xf32> to vector<2x32xf32>
    %172 = vector.extract_strided_slice %167 {offsets = [0, 96], sizes = [2, 32], strides = [1, 1]} : vector<2x128xf32> to vector<2x32xf32>
    %173 = arith.mulf %170, %154 : vector<2x32xf32>
    %174 = arith.mulf %169, %171 : vector<2x32xf32>
    %175 = arith.addf %173, %174 : vector<2x32xf32>
    %176 = math.tanh %175 : vector<2x32xf32>
    %177 = arith.mulf %172, %176 : vector<2x32xf32>
    %c14 = arith.constant 14 : index
    %c0_34 = arith.constant 0 : index
    %178 = vector.load %arg10[%c14, %c0_34] : memref<16x32xf32, #tpu.memory_space<vmem>>, vector<2x32xf32>
    tpu.vector_store %arg10[%c14, %c0_34], %177 {strides = array<i32>} : memref<16x32xf32, #tpu.memory_space<vmem>>, vector<2x32xf32>,
    %c0_35 = arith.constant 0 : index
    %c0_36 = arith.constant 0 : index
    %179 = vector.load %arg10[%c0_35, %c0_36] : memref<16x32xf32, #tpu.memory_space<vmem>>, vector<16x32xf32>
    %180 = arith.truncf %179 : vector<16x32xf32> to vector<16x32xbf16>
    %c0_37 = arith.constant 0 : index
    %c0_38 = arith.constant 0 : index
    %181 = vector.load %arg4[%c0_37, %c0_38] : memref<32x128xbf16, #tpu.memory_space<vmem>>, vector<32x128xbf16>
    %cst_39 = arith.constant dense<0.000000e+00> : vector<16x128xf32>
    %182 = tpu.matmul %180, %181, %cst_39 {dimension_numbers = #tpu.dot_dimension_numbers<[1], [0], [0], [1], [0, 0, 1, 1], [], []>} : vector<16x32xbf16>, vector<32x128xbf16>, vector<16x128xf32> -> vector<16x128xf32>
    %c0_40 = arith.constant 0 : index
    %c0_41 = arith.constant 0 : index
    %183 = vector.load %arg6[%c0_40, %c0_41] : memref<1x128xf32, #tpu.memory_space<vmem>>, vector<1x128xf32>
    %184 = vector.broadcast %183 : vector<1x128xf32> to vector<16x128xf32>
    %185 = arith.addf %182, %184 : vector<16x128xf32>
    %c0_42 = arith.constant 0 : index
    %c0_43 = arith.constant 0 : index
    %186 = vector.load %arg5[%c0_42, %c0_43] : memref<32x128xbf16, #tpu.memory_space<vmem>>, vector<32x128xbf16>
    %cst_44 = arith.constant 0.000000e+00 : f32
    %187 = vector.broadcast %cst_44 : f32 to vector<2x32xf32>
    %cst_45 = arith.constant 0.000000e+00 : f32
    %188 = vector.broadcast %cst_45 : f32 to vector<2x32xf32>
    %189 = vector.extract_strided_slice %185 {offsets = [0, 0], sizes = [2, 128], strides = [1, 1]} : vector<16x128xf32> to vector<2x128xf32>
    %190 = arith.truncf %187 : vector<2x32xf32> to vector<2x32xbf16>
    %cst_46 = arith.constant dense<0.000000e+00> : vector<2x128xf32>
    %191 = tpu.matmul %190, %186, %cst_46 {dimension_numbers = #tpu.dot_dimension_numbers<[1], [0], [0], [1], [0, 0, 1, 1], [], []>} : vector<2x32xbf16>, vector<32x128xbf16>, vector<2x128xf32> -> vector<2x128xf32>
    %192 = arith.addf %189, %191 : vector<2x128xf32>
    %193 = arith.negf %192 : vector<2x128xf32>
    %194 = math.exp %193 : vector<2x128xf32>
    %cst_47 = arith.constant 1.000000e+00 : f32
    %195 = vector.broadcast %cst_47 : f32 to vector<2x128xf32>
    %196 = arith.addf %195, %194 : vector<2x128xf32>
    %197 = arith.divf %195, %196 : vector<2x128xf32>
    %198 = math.tanh %192 : vector<2x128xf32>
    %199 = vector.extract_strided_slice %197 {offsets = [0, 0], sizes = [2, 32], strides = [1, 1]} : vector<2x128xf32> to vector<2x32xf32>
    %200 = vector.extract_strided_slice %197 {offsets = [0, 32], sizes = [2, 32], strides = [1, 1]} : vector<2x128xf32> to vector<2x32xf32>
    %201 = vector.extract_strided_slice %198 {offsets = [0, 64], sizes = [2, 32], strides = [1, 1]} : vector<2x128xf32> to vector<2x32xf32>
    %202 = vector.extract_strided_slice %197 {offsets = [0, 96], sizes = [2, 32], strides = [1, 1]} : vector<2x128xf32> to vector<2x32xf32>
    %203 = arith.mulf %200, %188 : vector<2x32xf32>
    %204 = arith.mulf %199, %201 : vector<2x32xf32>
    %205 = arith.addf %203, %204 : vector<2x32xf32>
    %206 = math.tanh %205 : vector<2x32xf32>
    %207 = arith.mulf %202, %206 : vector<2x32xf32>
    %208 = vector.extract_strided_slice %185 {offsets = [2, 0], sizes = [2, 128], strides = [1, 1]} : vector<16x128xf32> to vector<2x128xf32>
    %209 = arith.truncf %207 : vector<2x32xf32> to vector<2x32xbf16>
    %cst_48 = arith.constant dense<0.000000e+00> : vector<2x128xf32>
    %210 = tpu.matmul %209, %186, %cst_48 {dimension_numbers = #tpu.dot_dimension_numbers<[1], [0], [0], [1], [0, 0, 1, 1], [], []>} : vector<2x32xbf16>, vector<32x128xbf16>, vector<2x128xf32> -> vector<2x128xf32>
    %211 = arith.addf %208, %210 : vector<2x128xf32>
    %212 = arith.negf %211 : vector<2x128xf32>
    %213 = math.exp %212 : vector<2x128xf32>
    %cst_49 = arith.constant 1.000000e+00 : f32
    %214 = vector.broadcast %cst_49 : f32 to vector<2x128xf32>
    %215 = arith.addf %214, %213 : vector<2x128xf32>
    %216 = arith.divf %214, %215 : vector<2x128xf32>
    %217 = math.tanh %211 : vector<2x128xf32>
    %218 = vector.extract_strided_slice %216 {offsets = [0, 0], sizes = [2, 32], strides = [1, 1]} : vector<2x128xf32> to vector<2x32xf32>
    %219 = vector.extract_strided_slice %216 {offsets = [0, 32], sizes = [2, 32], strides = [1, 1]} : vector<2x128xf32> to vector<2x32xf32>
    %220 = vector.extract_strided_slice %217 {offsets = [0, 64], sizes = [2, 32], strides = [1, 1]} : vector<2x128xf32> to vector<2x32xf32>
    %221 = vector.extract_strided_slice %216 {offsets = [0, 96], sizes = [2, 32], strides = [1, 1]} : vector<2x128xf32> to vector<2x32xf32>
    %222 = arith.mulf %219, %205 : vector<2x32xf32>
    %223 = arith.mulf %218, %220 : vector<2x32xf32>
    %224 = arith.addf %222, %223 : vector<2x32xf32>
    %225 = math.tanh %224 : vector<2x32xf32>
    %226 = arith.mulf %221, %225 : vector<2x32xf32>
    %227 = vector.extract_strided_slice %185 {offsets = [4, 0], sizes = [2, 128], strides = [1, 1]} : vector<16x128xf32> to vector<2x128xf32>
    %228 = arith.truncf %226 : vector<2x32xf32> to vector<2x32xbf16>
    %cst_50 = arith.constant dense<0.000000e+00> : vector<2x128xf32>
    %229 = tpu.matmul %228, %186, %cst_50 {dimension_numbers = #tpu.dot_dimension_numbers<[1], [0], [0], [1], [0, 0, 1, 1], [], []>} : vector<2x32xbf16>, vector<32x128xbf16>, vector<2x128xf32> -> vector<2x128xf32>
    %230 = arith.addf %227, %229 : vector<2x128xf32>
    %231 = arith.negf %230 : vector<2x128xf32>
    %232 = math.exp %231 : vector<2x128xf32>
    %cst_51 = arith.constant 1.000000e+00 : f32
    %233 = vector.broadcast %cst_51 : f32 to vector<2x128xf32>
    %234 = arith.addf %233, %232 : vector<2x128xf32>
    %235 = arith.divf %233, %234 : vector<2x128xf32>
    %236 = math.tanh %230 : vector<2x128xf32>
    %237 = vector.extract_strided_slice %235 {offsets = [0, 0], sizes = [2, 32], strides = [1, 1]} : vector<2x128xf32> to vector<2x32xf32>
    %238 = vector.extract_strided_slice %235 {offsets = [0, 32], sizes = [2, 32], strides = [1, 1]} : vector<2x128xf32> to vector<2x32xf32>
    %239 = vector.extract_strided_slice %236 {offsets = [0, 64], sizes = [2, 32], strides = [1, 1]} : vector<2x128xf32> to vector<2x32xf32>
    %240 = vector.extract_strided_slice %235 {offsets = [0, 96], sizes = [2, 32], strides = [1, 1]} : vector<2x128xf32> to vector<2x32xf32>
    %241 = arith.mulf %238, %224 : vector<2x32xf32>
    %242 = arith.mulf %237, %239 : vector<2x32xf32>
    %243 = arith.addf %241, %242 : vector<2x32xf32>
    %244 = math.tanh %243 : vector<2x32xf32>
    %245 = arith.mulf %240, %244 : vector<2x32xf32>
    %246 = vector.extract_strided_slice %185 {offsets = [6, 0], sizes = [2, 128], strides = [1, 1]} : vector<16x128xf32> to vector<2x128xf32>
    %247 = arith.truncf %245 : vector<2x32xf32> to vector<2x32xbf16>
    %cst_52 = arith.constant dense<0.000000e+00> : vector<2x128xf32>
    %248 = tpu.matmul %247, %186, %cst_52 {dimension_numbers = #tpu.dot_dimension_numbers<[1], [0], [0], [1], [0, 0, 1, 1], [], []>} : vector<2x32xbf16>, vector<32x128xbf16>, vector<2x128xf32> -> vector<2x128xf32>
    %249 = arith.addf %246, %248 : vector<2x128xf32>
    %250 = arith.negf %249 : vector<2x128xf32>
    %251 = math.exp %250 : vector<2x128xf32>
    %cst_53 = arith.constant 1.000000e+00 : f32
    %252 = vector.broadcast %cst_53 : f32 to vector<2x128xf32>
    %253 = arith.addf %252, %251 : vector<2x128xf32>
    %254 = arith.divf %252, %253 : vector<2x128xf32>
    %255 = math.tanh %249 : vector<2x128xf32>
    %256 = vector.extract_strided_slice %254 {offsets = [0, 0], sizes = [2, 32], strides = [1, 1]} : vector<2x128xf32> to vector<2x32xf32>
    %257 = vector.extract_strided_slice %254 {offsets = [0, 32], sizes = [2, 32], strides = [1, 1]} : vector<2x128xf32> to vector<2x32xf32>
    %258 = vector.extract_strided_slice %255 {offsets = [0, 64], sizes = [2, 32], strides = [1, 1]} : vector<2x128xf32> to vector<2x32xf32>
    %259 = vector.extract_strided_slice %254 {offsets = [0, 96], sizes = [2, 32], strides = [1, 1]} : vector<2x128xf32> to vector<2x32xf32>
    %260 = arith.mulf %257, %243 : vector<2x32xf32>
    %261 = arith.mulf %256, %258 : vector<2x32xf32>
    %262 = arith.addf %260, %261 : vector<2x32xf32>
    %263 = math.tanh %262 : vector<2x32xf32>
    %264 = arith.mulf %259, %263 : vector<2x32xf32>
    %265 = vector.extract_strided_slice %185 {offsets = [8, 0], sizes = [2, 128], strides = [1, 1]} : vector<16x128xf32> to vector<2x128xf32>
    %266 = arith.truncf %264 : vector<2x32xf32> to vector<2x32xbf16>
    %cst_54 = arith.constant dense<0.000000e+00> : vector<2x128xf32>
    %267 = tpu.matmul %266, %186, %cst_54 {dimension_numbers = #tpu.dot_dimension_numbers<[1], [0], [0], [1], [0, 0, 1, 1], [], []>} : vector<2x32xbf16>, vector<32x128xbf16>, vector<2x128xf32> -> vector<2x128xf32>
    %268 = arith.addf %265, %267 : vector<2x128xf32>
    %269 = arith.negf %268 : vector<2x128xf32>
    %270 = math.exp %269 : vector<2x128xf32>
    %cst_55 = arith.constant 1.000000e+00 : f32
    %271 = vector.broadcast %cst_55 : f32 to vector<2x128xf32>
    %272 = arith.addf %271, %270 : vector<2x128xf32>
    %273 = arith.divf %271, %272 : vector<2x128xf32>
    %274 = math.tanh %268 : vector<2x128xf32>
    %275 = vector.extract_strided_slice %273 {offsets = [0, 0], sizes = [2, 32], strides = [1, 1]} : vector<2x128xf32> to vector<2x32xf32>
    %276 = vector.extract_strided_slice %273 {offsets = [0, 32], sizes = [2, 32], strides = [1, 1]} : vector<2x128xf32> to vector<2x32xf32>
    %277 = vector.extract_strided_slice %274 {offsets = [0, 64], sizes = [2, 32], strides = [1, 1]} : vector<2x128xf32> to vector<2x32xf32>
    %278 = vector.extract_strided_slice %273 {offsets = [0, 96], sizes = [2, 32], strides = [1, 1]} : vector<2x128xf32> to vector<2x32xf32>
    %279 = arith.mulf %276, %262 : vector<2x32xf32>
    %280 = arith.mulf %275, %277 : vector<2x32xf32>
    %281 = arith.addf %279, %280 : vector<2x32xf32>
    %282 = math.tanh %281 : vector<2x32xf32>
    %283 = arith.mulf %278, %282 : vector<2x32xf32>
    %284 = vector.extract_strided_slice %185 {offsets = [10, 0], sizes = [2, 128], strides = [1, 1]} : vector<16x128xf32> to vector<2x128xf32>
    %285 = arith.truncf %283 : vector<2x32xf32> to vector<2x32xbf16>
    %cst_56 = arith.constant dense<0.000000e+00> : vector<2x128xf32>
    %286 = tpu.matmul %285, %186, %cst_56 {dimension_numbers = #tpu.dot_dimension_numbers<[1], [0], [0], [1], [0, 0, 1, 1], [], []>} : vector<2x32xbf16>, vector<32x128xbf16>, vector<2x128xf32> -> vector<2x128xf32>
    %287 = arith.addf %284, %286 : vector<2x128xf32>
    %288 = arith.negf %287 : vector<2x128xf32>
    %289 = math.exp %288 : vector<2x128xf32>
    %cst_57 = arith.constant 1.000000e+00 : f32
    %290 = vector.broadcast %cst_57 : f32 to vector<2x128xf32>
    %291 = arith.addf %290, %289 : vector<2x128xf32>
    %292 = arith.divf %290, %291 : vector<2x128xf32>
    %293 = math.tanh %287 : vector<2x128xf32>
    %294 = vector.extract_strided_slice %292 {offsets = [0, 0], sizes = [2, 32], strides = [1, 1]} : vector<2x128xf32> to vector<2x32xf32>
    %295 = vector.extract_strided_slice %292 {offsets = [0, 32], sizes = [2, 32], strides = [1, 1]} : vector<2x128xf32> to vector<2x32xf32>
    %296 = vector.extract_strided_slice %293 {offsets = [0, 64], sizes = [2, 32], strides = [1, 1]} : vector<2x128xf32> to vector<2x32xf32>
    %297 = vector.extract_strided_slice %292 {offsets = [0, 96], sizes = [2, 32], strides = [1, 1]} : vector<2x128xf32> to vector<2x32xf32>
    %298 = arith.mulf %295, %281 : vector<2x32xf32>
    %299 = arith.mulf %294, %296 : vector<2x32xf32>
    %300 = arith.addf %298, %299 : vector<2x32xf32>
    %301 = math.tanh %300 : vector<2x32xf32>
    %302 = arith.mulf %297, %301 : vector<2x32xf32>
    %303 = vector.extract_strided_slice %185 {offsets = [12, 0], sizes = [2, 128], strides = [1, 1]} : vector<16x128xf32> to vector<2x128xf32>
    %304 = arith.truncf %302 : vector<2x32xf32> to vector<2x32xbf16>
    %cst_58 = arith.constant dense<0.000000e+00> : vector<2x128xf32>
    %305 = tpu.matmul %304, %186, %cst_58 {dimension_numbers = #tpu.dot_dimension_numbers<[1], [0], [0], [1], [0, 0, 1, 1], [], []>} : vector<2x32xbf16>, vector<32x128xbf16>, vector<2x128xf32> -> vector<2x128xf32>
    %306 = arith.addf %303, %305 : vector<2x128xf32>
    %307 = arith.negf %306 : vector<2x128xf32>
    %308 = math.exp %307 : vector<2x128xf32>
    %cst_59 = arith.constant 1.000000e+00 : f32
    %309 = vector.broadcast %cst_59 : f32 to vector<2x128xf32>
    %310 = arith.addf %309, %308 : vector<2x128xf32>
    %311 = arith.divf %309, %310 : vector<2x128xf32>
    %312 = math.tanh %306 : vector<2x128xf32>
    %313 = vector.extract_strided_slice %311 {offsets = [0, 0], sizes = [2, 32], strides = [1, 1]} : vector<2x128xf32> to vector<2x32xf32>
    %314 = vector.extract_strided_slice %311 {offsets = [0, 32], sizes = [2, 32], strides = [1, 1]} : vector<2x128xf32> to vector<2x32xf32>
    %315 = vector.extract_strided_slice %312 {offsets = [0, 64], sizes = [2, 32], strides = [1, 1]} : vector<2x128xf32> to vector<2x32xf32>
    %316 = vector.extract_strided_slice %311 {offsets = [0, 96], sizes = [2, 32], strides = [1, 1]} : vector<2x128xf32> to vector<2x32xf32>
    %317 = arith.mulf %314, %300 : vector<2x32xf32>
    %318 = arith.mulf %313, %315 : vector<2x32xf32>
    %319 = arith.addf %317, %318 : vector<2x32xf32>
    %320 = math.tanh %319 : vector<2x32xf32>
    %321 = arith.mulf %316, %320 : vector<2x32xf32>
    %322 = vector.extract_strided_slice %185 {offsets = [14, 0], sizes = [2, 128], strides = [1, 1]} : vector<16x128xf32> to vector<2x128xf32>
    %323 = arith.truncf %321 : vector<2x32xf32> to vector<2x32xbf16>
    %cst_60 = arith.constant dense<0.000000e+00> : vector<2x128xf32>
    %324 = tpu.matmul %323, %186, %cst_60 {dimension_numbers = #tpu.dot_dimension_numbers<[1], [0], [0], [1], [0, 0, 1, 1], [], []>} : vector<2x32xbf16>, vector<32x128xbf16>, vector<2x128xf32> -> vector<2x128xf32>
    %325 = arith.addf %322, %324 : vector<2x128xf32>
    %326 = arith.negf %325 : vector<2x128xf32>
    %327 = math.exp %326 : vector<2x128xf32>
    %cst_61 = arith.constant 1.000000e+00 : f32
    %328 = vector.broadcast %cst_61 : f32 to vector<2x128xf32>
    %329 = arith.addf %328, %327 : vector<2x128xf32>
    %330 = arith.divf %328, %329 : vector<2x128xf32>
    %331 = math.tanh %325 : vector<2x128xf32>
    %332 = vector.extract_strided_slice %330 {offsets = [0, 0], sizes = [2, 32], strides = [1, 1]} : vector<2x128xf32> to vector<2x32xf32>
    %333 = vector.extract_strided_slice %330 {offsets = [0, 32], sizes = [2, 32], strides = [1, 1]} : vector<2x128xf32> to vector<2x32xf32>
    %334 = vector.extract_strided_slice %331 {offsets = [0, 64], sizes = [2, 32], strides = [1, 1]} : vector<2x128xf32> to vector<2x32xf32>
    %335 = vector.extract_strided_slice %330 {offsets = [0, 96], sizes = [2, 32], strides = [1, 1]} : vector<2x128xf32> to vector<2x32xf32>
    %336 = arith.mulf %333, %319 : vector<2x32xf32>
    %337 = arith.mulf %332, %334 : vector<2x32xf32>
    %338 = arith.addf %336, %337 : vector<2x32xf32>
    %339 = math.tanh %338 : vector<2x32xf32>
    %340 = arith.mulf %335, %339 : vector<2x32xf32>
    %341 = arith.truncf %340 : vector<2x32xf32> to vector<2x32xbf16>
    %c0_62 = arith.constant 0 : index
    %c0_63 = arith.constant 0 : index
    %342 = vector.load %arg7[%c0_62, %c0_63] : memref<32x4xbf16, #tpu.memory_space<vmem>>, vector<32x4xbf16>
    %cst_64 = arith.constant dense<0.000000e+00> : vector<2x4xf32>
    %343 = tpu.matmul %341, %342, %cst_64 {dimension_numbers = #tpu.dot_dimension_numbers<[1], [0], [0], [1], [0, 0, 1, 1], [], []>} : vector<2x32xbf16>, vector<32x4xbf16>, vector<2x4xf32> -> vector<2x4xf32>
    %c0_65 = arith.constant 0 : index
    %c0_66 = arith.constant 0 : index
    %344 = vector.load %arg8[%c0_65, %c0_66] : memref<1x4xf32, #tpu.memory_space<vmem>>, vector<1x4xf32>
    %345 = vector.broadcast %344 : vector<1x4xf32> to vector<2x4xf32>
    %346 = arith.addf %343, %345 : vector<2x4xf32>
    %c0_67 = arith.constant 0 : index
    %c0_68 = arith.constant 0 : index
    %347 = vector.load %arg9[%c0_67, %c0_68] : memref<2x4xf32, #tpu.memory_space<vmem>>, vector<2x4xf32>
    tpu.vector_store %arg9[%c0_67, %c0_68], %346 {strides = array<i32>} : memref<2x4xf32, #tpu.memory_space<vmem>>, vector<2x4xf32>,
    return
  }
}

</mosaic_0001>

<llo_original>
// kernel: lstm_model_forward.1
$region0: #{lstm_model_forward.1}
  #allocation0 [shape = 'u32[]', space=smem, size = 0x4, offset = 0x4, fixed_abs, tag = 'smem constant byte address 0x4 - core index']
  #allocation1 [shape = 'u32[144,128]{1,0:T(1,128)}', space=vmem, size = 0x12000, scoped, tag = 'internal scratch']
  #allocation2 [shape = 'f32[16,32]{1,0:T(8,128)}', space=vmem, size = 0x2000, scoped, tag = 'scratch operand']
  %s0 = inlined_call_operand.vmem [shape: bf16[2,8,16], index: 0, kind: input, shape index: {}]
  %s1 = inlined_call_operand.vmem [shape: bf16[16,128], index: 1, kind: input, shape index: {}]
  %s2 = inlined_call_operand.vmem [shape: bf16[32,128], index: 2, kind: input, shape index: {}]
  %s3 = inlined_call_operand.vmem [shape: f32[1,128], index: 3, kind: input, shape index: {}]
  %s4 = inlined_call_operand.vmem [shape: bf16[32,128], index: 4, kind: input, shape index: {}]
  %s5 = inlined_call_operand.vmem [shape: bf16[32,128], index: 5, kind: input, shape index: {}]
  %s6 = inlined_call_operand.vmem [shape: f32[1,128], index: 6, kind: input, shape index: {}]
  %s7 = inlined_call_operand.vmem [shape: bf16[32,4], index: 7, kind: input, shape index: {}]
  %s8 = inlined_call_operand.vmem [shape: f32[1,4], index: 8, kind: input, shape index: {}]
  %s9 = inlined_call_operand.hbm [shape: f32[2,4], index: 9, kind: output, shape index: {}]
  %s10 = sld [smem:[#allocation0]]
  $region46: #{lstm_model_forward.1} parent=0
    _
  %s12 = ssub.s32 1, %s10
  %s13 = scalar_select 0, %s12, %s10
  $region1: #{lstm_model_forward.1} parent=0
    #allocation3 [shape = 'u8[1024]{0}', space=vmem, size = 0x400, scoped, tag = 'output window, operand 0, single buffered']
    #allocation4 [shape = 's32[1]{0}', space=sflag, size = 0x4, scoped, tag = 'scoped memory for lstm_model_forward.1']
    %14 = vsyncpa [#allocation4], 0
    // Predicated region
    $region2: #{lstm_model_forward.1} parent=1 // pred_check
      _
    $region3: #{lstm_model_forward.1} parent=1 // pred_check_branch
      %16 = sbr.rel (0) target = $region5
    $region4: #{lstm_model_forward.1} parent=1 // pred_region
      _
    $region5: #{lstm_model_forward.1} parent=1 // pred_fallthru
      _
    // Predicated region
    $region6: #{lstm_model_forward.1} parent=1 // pred_check
      _
    $region7: #{lstm_model_forward.1} parent=1 // pred_check_branch
      %18 = sbr.rel (0) target = $region9
    $region8: #{lstm_model_forward.1} parent=1 // pred_region
      _
    $region9: #{lstm_model_forward.1} parent=1 // pred_fallthru
      _
    // Predicated region
    $region10: #{lstm_model_forward.1} parent=1 // pred_check
      _
    $region11: #{lstm_model_forward.1} parent=1 // pred_check_branch
      %20 = sbr.rel (0) target = $region13
    $region12: #{lstm_model_forward.1} parent=1 // pred_region
      _
    $region13: #{lstm_model_forward.1} parent=1 // pred_fallthru
      _
    // Predicated region
    $region14: #{lstm_model_forward.1} parent=1 // pred_check
      _
    $region15: #{lstm_model_forward.1} parent=1 // pred_check_branch
      %22 = sbr.rel (0) target = $region17
    $region16: #{lstm_model_forward.1} parent=1 // pred_region
      _
    $region17: #{lstm_model_forward.1} parent=1 // pred_fallthru
      _
    // Predicated region
    $region18: #{lstm_model_forward.1} parent=1 // pred_check
      _
    $region19: #{lstm_model_forward.1} parent=1 // pred_check_branch
      %24 = sbr.rel (0) target = $region21
    $region20: #{lstm_model_forward.1} parent=1 // pred_region
      _
    $region21: #{lstm_model_forward.1} parent=1 // pred_fallthru
      _
    // Predicated region
    $region22: #{lstm_model_forward.1} parent=1 // pred_check
      _
    $region23: #{lstm_model_forward.1} parent=1 // pred_check_branch
      %26 = sbr.rel (0) target = $region25
    $region24: #{lstm_model_forward.1} parent=1 // pred_region
      _
    $region25: #{lstm_model_forward.1} parent=1 // pred_fallthru
      _
    // Predicated region
    $region26: #{lstm_model_forward.1} parent=1 // pred_check
      _
    $region27: #{lstm_model_forward.1} parent=1 // pred_check_branch
      %28 = sbr.rel (0) target = $region29
    $region28: #{lstm_model_forward.1} parent=1 // pred_region
      _
    $region29: #{lstm_model_forward.1} parent=1 // pred_fallthru
      _
    // Predicated region
    $region30: #{lstm_model_forward.1} parent=1 // pred_check
      _
    $region31: #{lstm_model_forward.1} parent=1 // pred_check_branch
      %30 = sbr.rel (0) target = $region33
    $region32: #{lstm_model_forward.1} parent=1 // pred_region
      _
    $region33: #{lstm_model_forward.1} parent=1 // pred_fallthru
      _
    // Predicated region
    $region34: #{lstm_model_forward.1} parent=1 // pred_check
      _
    $region35: #{lstm_model_forward.1} parent=1 // pred_check_branch
      %32 = sbr.rel (0) target = $region37
    $region36: #{lstm_model_forward.1} parent=1 // pred_region
      _
    $region37: #{lstm_model_forward.1} parent=1 // pred_fallthru
      _
    %v34 = vld [vmem:[%s0] sm:$0xf]
    %v35 = vld [vmem:[%s0 + $0x4] sm:$0xf]
    %v36 = vld [vmem:[%s1] sm:$0xf]
    %v37 = vld [vmem:[%s1 + $0x4] sm:$0xf]
    %v38 = vld [vmem:[%s3] sm:$0x1]
    %v40 = vlaneseq
    %v41 = vshrl.u32 %v40, 7
    %v42 = vsub.s32 0, %v41
    %v43 = vrot.slane %v38, %v42
    %v47 = vunpack.c.l.b16 %v34
    %v48 = vunpack.c.l.b16 %v35
    %v49 = vpack.c.b16 %v48, %v47
    %v52 = vunpack.c.l.b16 %v36
    %v53 = vunpack.c.l.b16 %v37
    %v54 = vpack.c.b16 %v53, %v52
    %vm56 = vcmask 130048
    %v58 = vsel %vm56, %v49, 0
    %60 = vmatprep.subr.bf16.mxu0 0
    %61 = vmatpush1.bf16.msra.mxu0 %v54
    %62 = vmatprep.subr.bf16.mxu0 0
    %63 = vmatpush1.bf16.msra.mxu0 0
    %64 = vmatprep.subr.bf16.mxu0 0
    %65 = vmatpush1.bf16.msra.mxu0 0
    %66 = vmatprep.subr.bf16.mxu0 0
    %67 = vmatpush1.bf16.msra.mxu0 0
    %68 = vmatprep.subr.bf16.mxu0 0
    %69 = vmatpush1.bf16.msra.mxu0 0
    %70 = vmatprep.subr.bf16.mxu0 0
    %71 = vmatpush1.bf16.msra.mxu0 0
    %72 = vmatprep.subr.bf16.mxu0 0
    %73 = vmatpush1.bf16.msra.mxu0 0
    %74 = vmatprep.subr.bf16.mxu0 0
    %75 = vmatpush1.bf16.msra.mxu0 0
    %76 = vmatprep.subr.bf16.mxu0 0
    %77 = vmatpush1.bf16.msra.mxu0 0
    %78 = vmatprep.subr.bf16.mxu0 0
    %79 = vmatpush1.bf16.msra.mxu0 0
    %80 = vmatprep.subr.bf16.mxu0 0
    %81 = vmatpush1.bf16.msra.mxu0 0
    %82 = vmatprep.subr.bf16.mxu0 0
    %83 = vmatpush1.bf16.msra.mxu0 0
    %84 = vmatprep.subr.bf16.mxu0 0
    %85 = vmatpush1.bf16.msra.mxu0 0
    %86 = vmatprep.subr.bf16.mxu0 0
    %87 = vmatpush1.bf16.msra.mxu0 0
    %88 = vmatprep.subr.bf16.mxu0 0
    %89 = vmatpush1.bf16.msra.mxu0 0
    %90 = vmatprep.subr.bf16.mxu0 0
    %91 = vmatpush1.bf16.msra.mxu0 0
    %92 = vmatprep.mubr.bf16.mxu0 0
    %93 = vmatmul.mubr.bf16.gmra.mrb[0].mxu0 %v58
    %v94 = vpop.f32.mrb[0].mxu0
    %v95 = vadd.f32 %v43, %v94
    %v96 = vpop.f32.mrb[0].mxu0
    %v97 = vpop.f32.mrb[0].mxu0
    %v98 = vadd.f32 %v43, %v97
    %v99 = vpop.f32.mrb[0].mxu0
    %100 = vdwg.mxu0
    %v101 = vld [vmem:[%s2] sm:$0xf]
    %v102 = vld [vmem:[%s2 + $0x4] sm:$0xf]
    %v103 = vld [vmem:[%s2 + $0x8] sm:$0xf]
    %v104 = vld [vmem:[%s2 + $0xc] sm:$0xf]
    %v109 = vunpack.c.l.b16 %v101
    %v110 = vunpack.c.l.b16 %v102
    %v111 = vunpack.c.l.b16 %v103
    %v112 = vunpack.c.l.b16 %v104
    %v113 = vpack.c.b16 %v110, %v109
    %v114 = vpack.c.b16 %v112, %v111
    %vm117 = vcmask 261120
    %v119 = vsel %vm117, 0, 0
    %121 = vmatprep.subr.bf16.mxu0 0
    %122 = vmatpush1.bf16.msra.mxu0 %v113
    %123 = vmatprep.subr.bf16.mxu0 0
    %124 = vmatpush1.bf16.msra.mxu0 %v114
    %125 = vmatprep.subr.bf16.mxu0 0
    %126 = vmatpush1.bf16.msra.mxu0 0
    %127 = vmatprep.subr.bf16.mxu0 0
    %128 = vmatpush1.bf16.msra.mxu0 0
    %129 = vmatprep.subr.bf16.mxu0 0
    %130 = vmatpush1.bf16.msra.mxu0 0
    %131 = vmatprep.subr.bf16.mxu0 0
    %132 = vmatpush1.bf16.msra.mxu0 0
    %133 = vmatprep.subr.bf16.mxu0 0
    %134 = vmatpush1.bf16.msra.mxu0 0
    %135 = vmatprep.subr.bf16.mxu0 0
    %136 = vmatpush1.bf16.msra.mxu0 0
    %137 = vmatprep.subr.bf16.mxu0 0
    %138 = vmatpush1.bf16.msra.mxu0 0
    %139 = vmatprep.subr.bf16.mxu0 0
    %140 = vmatpush1.bf16.msra.mxu0 0
    %141 = vmatprep.subr.bf16.mxu0 0
    %142 = vmatpush1.bf16.msra.mxu0 0
    %143 = vmatprep.subr.bf16.mxu0 0
    %144 = vmatpush1.bf16.msra.mxu0 0
    %145 = vmatprep.subr.bf16.mxu0 0
    %146 = vmatpush1.bf16.msra.mxu0 0
    %147 = vmatprep.subr.bf16.mxu0 0
    %148 = vmatpush1.bf16.msra.mxu0 0
    %149 = vmatprep.subr.bf16.mxu0 0
    %150 = vmatpush1.bf16.msra.mxu0 0
    %151 = vmatprep.subr.bf16.mxu0 0
    %152 = vmatpush1.bf16.msra.mxu0 0
    %153 = vmatprep.mubr.bf16.mxu0 0
    %154 = vmatmul.mubr.bf16.gmra.mrb[0].mxu0 %v119
    %v155 = vpop.f32.mrb[0].mxu0
    %v156 = vadd.f32 0.0, %v155
    %v157 = vpop.f32.mrb[0].mxu0
    %v158 = vpop.f32.mrb[0].mxu0
    %v159 = vpop.f32.mrb[0].mxu0
    %160 = vdwg.mxu0
    %v162 = vrot.slane %v156, 1
    %v165 = vadd.f32 %v95, %v156
    %v166 = vadd.f32 %v98, %v162
    %v167 = vxor.u32 %v165, 2147483648
    %v168 = vxor.u32 %v166, 2147483648
    %v169 = vmul.f32 %v167, 1.442695
    %v170 = vpow.pop %v169
    %v171 = vmul.f32 %v168, 1.442695
    %v172 = vpow.pop %v171
    %v173 = vadd.f32 %v170, 1.0
    %v174 = vadd.f32 %v172, 1.0
    %v175 = vrcp.pop %v173
    %v176 = vmul.f32 1.0, %v175
    %v177 = vrcp.pop %v174
    %v178 = vmul.f32 1.0, %v177
    %v179 = vtanh.pop %v165
    %v180 = vtanh.pop %v166
    %v181 = vmul.f32 %v176, 0.0
    %v182 = vmul.f32 %v178, 0.0
    %185 = vrot.lane.b32.xlu0 %v179, 64
    %v186 = vpop.permute.xlu0 %185
    %187 = vrot.lane.b32.xlu0 %v180, 64
    %v188 = vpop.permute.xlu0 %187
    %v191 = vmul.f32 %v176, %v186
    %v192 = vmul.f32 %v178, %v188
    %195 = vrot.lane.b32.xlu0 %v191, 32
    %v196 = vpop.permute.xlu0 %195
    %197 = vrot.lane.b32.xlu0 %v192, 32
    %v198 = vpop.permute.xlu0 %197
    %v201 = vadd.f32 %v181, %v196
    %v202 = vadd.f32 %v182, %v198
    %v203 = vtanh.pop %v201
    %v204 = vtanh.pop %v202
    %207 = vrot.lane.b32.xlu0 %v203, 64
    %v208 = vpop.permute.xlu0 %207
    %209 = vrot.lane.b32.xlu0 %v204, 64
    %v210 = vpop.permute.xlu0 %209
    %v213 = vmul.f32 %v176, %v208
    %v214 = vmul.f32 %v178, %v210
    %v217 = vrot.slane %v214, 7
    %vm218 = vcmask 1041409
    %v219 = vsel %vm218, %v217, %v213
    %220 = vrot.lane.b32.xlu0 %v219, 32
    %v221 = vpop.permute.xlu0 %220
    %vm223 = vcmask 254976
    %224 = vst.msk [vmem:[#allocation2] sm:$0x3] %vm223, %v221
    %v225 = vpack.c.bf16 %v213, %v213
    %v226 = vpack.c.bf16 %v214, %v214
    %v229 = vunpack.c.l.b16 %v225
    %v230 = vunpack.c.l.b16 %v226
    %v231 = vrot.slane %v230, 7
    %v232 = vsel %vm218, %v231, %v229
    %v233 = vpack.c.b16 %v232, %v232
    %234 = vrot.lane.b32.xlu0 %v233, 32
    %v235 = vpop.permute.xlu0 %234
    %v237 = vsel %vm117, %v235, 0
    %239 = vmatprep.subr.bf16.mxu0 0
    %240 = vmatpush1.bf16.msra.mxu0 %v113
    %241 = vmatprep.subr.bf16.mxu0 0
    %242 = vmatpush1.bf16.msra.mxu0 %v114
    %243 = vmatprep.subr.bf16.mxu0 0
    %244 = vmatpush1.bf16.msra.mxu0 0
    %245 = vmatprep.subr.bf16.mxu0 0
    %246 = vmatpush1.bf16.msra.mxu0 0
    %247 = vmatprep.subr.bf16.mxu0 0
    %248 = vmatpush1.bf16.msra.mxu0 0
    %249 = vmatprep.subr.bf16.mxu0 0
    %250 = vmatpush1.bf16.msra.mxu0 0
    %251 = vmatprep.subr.bf16.mxu0 0
    %252 = vmatpush1.bf16.msra.mxu0 0
    %253 = vmatprep.subr.bf16.mxu0 0
    %254 = vmatpush1.bf16.msra.mxu0 0
    %255 = vmatprep.subr.bf16.mxu0 0
    %256 = vmatpush1.bf16.msra.mxu0 0
    %257 = vmatprep.subr.bf16.mxu0 0
    %258 = vmatpush1.bf16.msra.mxu0 0
    %259 = vmatprep.subr.bf16.mxu0 0
    %260 = vmatpush1.bf16.msra.mxu0 0
    %261 = vmatprep.subr.bf16.mxu0 0
    %262 = vmatpush1.bf16.msra.mxu0 0
    %263 = vmatprep.subr.bf16.mxu0 0
    %264 = vmatpush1.bf16.msra.mxu0 0
    %265 = vmatprep.subr.bf16.mxu0 0
    %266 = vmatpush1.bf16.msra.mxu0 0
    %267 = vmatprep.subr.bf16.mxu0 0
    %268 = vmatpush1.bf16.msra.mxu0 0
    %269 = vmatprep.subr.bf16.mxu0 0
    %270 = vmatpush1.bf16.msra.mxu0 0
    %271 = vmatprep.mubr.bf16.mxu0 0
    %272 = vmatmul.mubr.bf16.gmra.mrb[0].mxu0 %v237
    %v273 = vpop.f32.mrb[0].mxu0
    %v274 = vadd.f32 0.0, %v273
    %v275 = vpop.f32.mrb[0].mxu0
    %v276 = vpop.f32.mrb[0].mxu0
    %v277 = vpop.f32.mrb[0].mxu0
    %278 = vdwg.mxu0
    %v280 = vrot.slane %v274, 7
    %v283 = vadd.f32 %v95, %v280
    %v284 = vadd.f32 %v98, %v274
    %v285 = vxor.u32 %v283, 2147483648
    %v286 = vxor.u32 %v284, 2147483648
    %v287 = vmul.f32 %v285, 1.442695
    %v288 = vpow.pop %v287
    %v289 = vmul.f32 %v286, 1.442695
    %v290 = vpow.pop %v289
    %v291 = vadd.f32 %v288, 1.0
    %v292 = vadd.f32 %v290, 1.0
    %v293 = vrcp.pop %v291
    %v294 = vmul.f32 1.0, %v293
    %v295 = vrcp.pop %v292
    %v296 = vmul.f32 1.0, %v295
    %v297 = vtanh.pop %v283
    %v298 = vtanh.pop %v284
    %v301 = vrot.slane %v201, 7
    %v302 = vrot.slane %v202, 7
    %v305 = vmul.f32 %v294, %v301
    %v306 = vmul.f32 %v296, %v302
    %309 = vrot.lane.b32.xlu0 %v297, 64
    %v310 = vpop.permute.xlu0 %309
    %311 = vrot.lane.b32.xlu0 %v298, 64
    %v312 = vpop.permute.xlu0 %311
    %v315 = vmul.f32 %v294, %v310
    %v316 = vmul.f32 %v296, %v312
    %319 = vrot.lane.b32.xlu0 %v315, 32
    %v320 = vpop.permute.xlu0 %319
    %321 = vrot.lane.b32.xlu0 %v316, 32
    %v322 = vpop.permute.xlu0 %321
    %v325 = vadd.f32 %v305, %v320
    %v326 = vadd.f32 %v306, %v322
    %v327 = vtanh.pop %v325
    %v328 = vtanh.pop %v326
    %331 = vrot.lane.b32.xlu0 %v327, 64
    %v332 = vpop.permute.xlu0 %331
    %333 = vrot.lane.b32.xlu0 %v328, 64
    %v334 = vpop.permute.xlu0 %333
    %v337 = vmul.f32 %v294, %v332
    %v338 = vmul.f32 %v296, %v334
    %v341 = vrot.slane %v338, 7
    %vm342 = vcmask 1042434
    %v343 = vsel %vm342, %v341, %v337
    %344 = vrot.lane.b32.xlu0 %v343, 32
    %v345 = vpop.permute.xlu0 %344
    %vm347 = vcmask 256001
    %348 = vst.msk [vmem:[#allocation2 + $0x1] sm:$0x6] %vm347, %v345
    %v349 = vpack.c.bf16 %v337, %v337
    %v350 = vpack.c.bf16 %v338, %v338
    %v353 = vunpack.c.l.b16 %v349
    %v354 = vunpack.c.l.b16 %v350
    %v355 = vrot.slane %v353, 1
    %v356 = vsel %vm218, %v354, %v355
    %v357 = vpack.c.b16 %v356, %v356
    %358 = vrot.lane.b32.xlu0 %v357, 32
    %v359 = vpop.permute.xlu0 %358
    %v361 = vsel %vm117, %v359, 0
    %363 = vmatprep.subr.bf16.mxu0 0
    %364 = vmatpush1.bf16.msra.mxu0 %v113
    %365 = vmatprep.subr.bf16.mxu0 0
    %366 = vmatpush1.bf16.msra.mxu0 %v114
    %367 = vmatprep.subr.bf16.mxu0 0
    %368 = vmatpush1.bf16.msra.mxu0 0
    %369 = vmatprep.subr.bf16.mxu0 0
    %370 = vmatpush1.bf16.msra.mxu0 0
    %371 = vmatprep.subr.bf16.mxu0 0
    %372 = vmatpush1.bf16.msra.mxu0 0
    %373 = vmatprep.subr.bf16.mxu0 0
    %374 = vmatpush1.bf16.msra.mxu0 0
    %375 = vmatprep.subr.bf16.mxu0 0
    %376 = vmatpush1.bf16.msra.mxu0 0
    %377 = vmatprep.subr.bf16.mxu0 0
    %378 = vmatpush1.bf16.msra.mxu0 0
    %379 = vmatprep.subr.bf16.mxu0 0
    %380 = vmatpush1.bf16.msra.mxu0 0
    %381 = vmatprep.subr.bf16.mxu0 0
    %382 = vmatpush1.bf16.msra.mxu0 0
    %383 = vmatprep.subr.bf16.mxu0 0
    %384 = vmatpush1.bf16.msra.mxu0 0
    %385 = vmatprep.subr.bf16.mxu0 0
    %386 = vmatpush1.bf16.msra.mxu0 0
    %387 = vmatprep.subr.bf16.mxu0 0
    %388 = vmatpush1.bf16.msra.mxu0 0
    %389 = vmatprep.subr.bf16.mxu0 0
    %390 = vmatpush1.bf16.msra.mxu0 0
    %391 = vmatprep.subr.bf16.mxu0 0
    %392 = vmatpush1.bf16.msra.mxu0 0
    %393 = vmatprep.subr.bf16.mxu0 0
    %394 = vmatpush1.bf16.msra.mxu0 0
    %395 = vmatprep.mubr.bf16.mxu0 0
    %396 = vmatmul.mubr.bf16.gmra.mrb[0].mxu0 %v361
    %v397 = vpop.f32.mrb[0].mxu0
    %v398 = vadd.f32 0.0, %v397
    %v399 = vpop.f32.mrb[0].mxu0
    %v400 = vpop.f32.mrb[0].mxu0
    %v401 = vpop.f32.mrb[0].mxu0
    %402 = vdwg.mxu0
    %v404 = vrot.slane %v398, 6
    %v405 = vrot.slane %v398, 7
    %v408 = vadd.f32 %v95, %v404
    %v409 = vadd.f32 %v98, %v405
    %v410 = vxor.u32 %v408, 2147483648
    %v411 = vxor.u32 %v409, 2147483648
    %v412 = vmul.f32 %v410, 1.442695
    %v413 = vpow.pop %v412
    %v414 = vmul.f32 %v411, 1.442695
    %v415 = vpow.pop %v414
    %v416 = vadd.f32 %v413, 1.0
    %v417 = vadd.f32 %v415, 1.0
    %v418 = vrcp.pop %v416
    %v419 = vmul.f32 1.0, %v418
    %v420 = vrcp.pop %v417
    %v421 = vmul.f32 1.0, %v420
    %v422 = vtanh.pop %v408
    %v423 = vtanh.pop %v409
    %v426 = vrot.slane %v325, 7
    %v427 = vrot.slane %v326, 7
    %v430 = vmul.f32 %v419, %v426
    %v431 = vmul.f32 %v421, %v427
    %434 = vrot.lane.b32.xlu0 %v422, 64
    %v435 = vpop.permute.xlu0 %434
    %436 = vrot.lane.b32.xlu0 %v423, 64
    %v437 = vpop.permute.xlu0 %436
    %v440 = vmul.f32 %v419, %v435
    %v441 = vmul.f32 %v421, %v437
    %444 = vrot.lane.b32.xlu0 %v440, 32
    %v445 = vpop.permute.xlu0 %444
    %446 = vrot.lane.b32.xlu0 %v441, 32
    %v447 = vpop.permute.xlu0 %446
    %v450 = vadd.f32 %v430, %v445
    %v451 = vadd.f32 %v431, %v447
    %v452 = vtanh.pop %v450
    %v453 = vtanh.pop %v451
    %456 = vrot.lane.b32.xlu0 %v452, 64
    %v457 = vpop.permute.xlu0 %456
    %458 = vrot.lane.b32.xlu0 %v453, 64
    %v459 = vpop.permute.xlu0 %458
    %v462 = vmul.f32 %v419, %v457
    %v463 = vmul.f32 %v421, %v459
    %v466 = vrot.slane %v463, 7
    %vm467 = vcmask 1043459
    %v468 = vsel %vm467, %v466, %v462
    %469 = vrot.lane.b32.xlu0 %v468, 32
    %v470 = vpop.permute.xlu0 %469
    %vm472 = vcmask 257026
    %473 = vst.msk [vmem:[#allocation2 + $0x2] sm:$0xc] %vm472, %v470
    %v474 = vpack.c.bf16 %v462, %v462
    %v475 = vpack.c.bf16 %v463, %v463
    %v478 = vunpack.c.l.b16 %v474
    %v479 = vunpack.c.l.b16 %v475
    %v480 = vrot.slane %v478, 2
    %v481 = vrot.slane %v479, 1
    %v482 = vsel %vm218, %v481, %v480
    %v483 = vpack.c.b16 %v482, %v482
    %484 = vrot.lane.b32.xlu0 %v483, 32
    %v485 = vpop.permute.xlu0 %484
    %v487 = vsel %vm117, %v485, 0
    %489 = vmatprep.subr.bf16.mxu0 0
    %490 = vmatpush1.bf16.msra.mxu0 %v113
    %491 = vmatprep.subr.bf16.mxu0 0
    %492 = vmatpush1.bf16.msra.mxu0 %v114
    %493 = vmatprep.subr.bf16.mxu0 0
    %494 = vmatpush1.bf16.msra.mxu0 0
    %495 = vmatprep.subr.bf16.mxu0 0
    %496 = vmatpush1.bf16.msra.mxu0 0
    %497 = vmatprep.subr.bf16.mxu0 0
    %498 = vmatpush1.bf16.msra.mxu0 0
    %499 = vmatprep.subr.bf16.mxu0 0
    %500 = vmatpush1.bf16.msra.mxu0 0
    %501 = vmatprep.subr.bf16.mxu0 0
    %502 = vmatpush1.bf16.msra.mxu0 0
    %503 = vmatprep.subr.bf16.mxu0 0
    %504 = vmatpush1.bf16.msra.mxu0 0
    %505 = vmatprep.subr.bf16.mxu0 0
    %506 = vmatpush1.bf16.msra.mxu0 0
    %507 = vmatprep.subr.bf16.mxu0 0
    %508 = vmatpush1.bf16.msra.mxu0 0
    %509 = vmatprep.subr.bf16.mxu0 0
    %510 = vmatpush1.bf16.msra.mxu0 0
    %511 = vmatprep.subr.bf16.mxu0 0
    %512 = vmatpush1.bf16.msra.mxu0 0
    %513 = vmatprep.subr.bf16.mxu0 0
    %514 = vmatpush1.bf16.msra.mxu0 0
    %515 = vmatprep.subr.bf16.mxu0 0
    %516 = vmatpush1.bf16.msra.mxu0 0
    %517 = vmatprep.subr.bf16.mxu0 0
    %518 = vmatpush1.bf16.msra.mxu0 0
    %519 = vmatprep.subr.bf16.mxu0 0
    %520 = vmatpush1.bf16.msra.mxu0 0
    %521 = vmatprep.mubr.bf16.mxu0 0
    %522 = vmatmul.mubr.bf16.gmra.mrb[0].mxu0 %v487
    %v523 = vpop.f32.mrb[0].mxu0
    %v524 = vadd.f32 0.0, %v523
    %v525 = vpop.f32.mrb[0].mxu0
    %v526 = vpop.f32.mrb[0].mxu0
    %v527 = vpop.f32.mrb[0].mxu0
    %528 = vdwg.mxu0
    %v530 = vrot.slane %v524, 5
    %v531 = vrot.slane %v524, 6
    %v534 = vadd.f32 %v95, %v530
    %v535 = vadd.f32 %v98, %v531
    %v536 = vxor.u32 %v534, 2147483648
    %v537 = vxor.u32 %v535, 2147483648
    %v538 = vmul.f32 %v536, 1.442695
    %v539 = vpow.pop %v538
    %v540 = vmul.f32 %v537, 1.442695
    %v541 = vpow.pop %v540
    %v542 = vadd.f32 %v539, 1.0
    %v543 = vadd.f32 %v541, 1.0
    %v544 = vrcp.pop %v542
    %v545 = vmul.f32 1.0, %v544
    %v546 = vrcp.pop %v543
    %v547 = vmul.f32 1.0, %v546
    %v548 = vtanh.pop %v534
    %v549 = vtanh.pop %v535
    %v552 = vrot.slane %v450, 7
    %v553 = vrot.slane %v451, 7
    %v556 = vmul.f32 %v545, %v552
    %v557 = vmul.f32 %v547, %v553
    %560 = vrot.lane.b32.xlu0 %v548, 64
    %v561 = vpop.permute.xlu0 %560
    %562 = vrot.lane.b32.xlu0 %v549, 64
    %v563 = vpop.permute.xlu0 %562
    %v566 = vmul.f32 %v545, %v561
    %v567 = vmul.f32 %v547, %v563
    %570 = vrot.lane.b32.xlu0 %v566, 32
    %v571 = vpop.permute.xlu0 %570
    %572 = vrot.lane.b32.xlu0 %v567, 32
    %v573 = vpop.permute.xlu0 %572
    %v576 = vadd.f32 %v556, %v571
    %v577 = vadd.f32 %v557, %v573
    %v578 = vtanh.pop %v576
    %v579 = vtanh.pop %v577
    %582 = vrot.lane.b32.xlu0 %v578, 64
    %v583 = vpop.permute.xlu0 %582
    %584 = vrot.lane.b32.xlu0 %v579, 64
    %v585 = vpop.permute.xlu0 %584
    %v588 = vmul.f32 %v545, %v583
    %v589 = vmul.f32 %v547, %v585
    %v592 = vrot.slane %v589, 7
    %vm593 = vcmask 1044484
    %v594 = vsel %vm593, %v592, %v588
    %595 = vrot.lane.b32.xlu0 %v594, 32
    %v596 = vpop.permute.xlu0 %595
    %vm598 = vcmask 258051
    %599 = vst.msk [vmem:[#allocation2 + $0x3] sm:$0x18] %vm598, %v596
    %v600 = vpack.c.bf16 %v588, %v588
    %v601 = vpack.c.bf16 %v589, %v589
    %v604 = vunpack.c.l.b16 %v600
    %v605 = vunpack.c.l.b16 %v601
    %v606 = vrot.slane %v604, 3
    %v607 = vrot.slane %v605, 2
    %v608 = vsel %vm218, %v607, %v606
    %v609 = vpack.c.b16 %v608, %v608
    %610 = vrot.lane.b32.xlu0 %v609, 32
    %v611 = vpop.permute.xlu0 %610
    %v613 = vsel %vm117, %v611, 0
    %615 = vmatprep.subr.bf16.mxu0 0
    %616 = vmatpush1.bf16.msra.mxu0 %v113
    %617 = vmatprep.subr.bf16.mxu0 0
    %618 = vmatpush1.bf16.msra.mxu0 %v114
    %619 = vmatprep.subr.bf16.mxu0 0
    %620 = vmatpush1.bf16.msra.mxu0 0
    %621 = vmatprep.subr.bf16.mxu0 0
    %622 = vmatpush1.bf16.msra.mxu0 0
    %623 = vmatprep.subr.bf16.mxu0 0
    %624 = vmatpush1.bf16.msra.mxu0 0
    %625 = vmatprep.subr.bf16.mxu0 0
    %626 = vmatpush1.bf16.msra.mxu0 0
    %627 = vmatprep.subr.bf16.mxu0 0
    %628 = vmatpush1.bf16.msra.mxu0 0
    %629 = vmatprep.subr.bf16.mxu0 0
    %630 = vmatpush1.bf16.msra.mxu0 0
    %631 = vmatprep.subr.bf16.mxu0 0
    %632 = vmatpush1.bf16.msra.mxu0 0
    %633 = vmatprep.subr.bf16.mxu0 0
    %634 = vmatpush1.bf16.msra.mxu0 0
    %635 = vmatprep.subr.bf16.mxu0 0
    %636 = vmatpush1.bf16.msra.mxu0 0
    %637 = vmatprep.subr.bf16.mxu0 0
    %638 = vmatpush1.bf16.msra.mxu0 0
    %639 = vmatprep.subr.bf16.mxu0 0
    %640 = vmatpush1.bf16.msra.mxu0 0
    %641 = vmatprep.subr.bf16.mxu0 0
    %642 = vmatpush1.bf16.msra.mxu0 0
    %643 = vmatprep.subr.bf16.mxu0 0
    %644 = vmatpush1.bf16.msra.mxu0 0
    %645 = vmatprep.subr.bf16.mxu0 0
    %646 = vmatpush1.bf16.msra.mxu0 0
    %647 = vmatprep.mubr.bf16.mxu0 0
    %648 = vmatmul.mubr.bf16.gmra.mrb[0].mxu0 %v613
    %v649 = vpop.f32.mrb[0].mxu0
    %v650 = vadd.f32 0.0, %v649
    %v651 = vpop.f32.mrb[0].mxu0
    %v652 = vpop.f32.mrb[0].mxu0
    %v653 = vpop.f32.mrb[0].mxu0
    %654 = vdwg.mxu0
    %v656 = vrot.slane %v650, 4
    %v657 = vrot.slane %v650, 5
    %v660 = vadd.f32 %v95, %v656
    %v661 = vadd.f32 %v98, %v657
    %v662 = vxor.u32 %v660, 2147483648
    %v663 = vxor.u32 %v661, 2147483648
    %v664 = vmul.f32 %v662, 1.442695
    %v665 = vpow.pop %v664
    %v666 = vmul.f32 %v663, 1.442695
    %v667 = vpow.pop %v666
    %v668 = vadd.f32 %v665, 1.0
    %v669 = vadd.f32 %v667, 1.0
    %v670 = vrcp.pop %v668
    %v671 = vmul.f32 1.0, %v670
    %v672 = vrcp.pop %v669
    %v673 = vmul.f32 1.0, %v672
    %v674 = vtanh.pop %v660
    %v675 = vtanh.pop %v661
    %v678 = vrot.slane %v576, 7
    %v679 = vrot.slane %v577, 7
    %v682 = vmul.f32 %v671, %v678
    %v683 = vmul.f32 %v673, %v679
    %686 = vrot.lane.b32.xlu0 %v674, 64
    %v687 = vpop.permute.xlu0 %686
    %688 = vrot.lane.b32.xlu0 %v675, 64
    %v689 = vpop.permute.xlu0 %688
    %v692 = vmul.f32 %v671, %v687
    %v693 = vmul.f32 %v673, %v689
    %696 = vrot.lane.b32.xlu0 %v692, 32
    %v697 = vpop.permute.xlu0 %696
    %698 = vrot.lane.b32.xlu0 %v693, 32
    %v699 = vpop.permute.xlu0 %698
    %v702 = vadd.f32 %v682, %v697
    %v703 = vadd.f32 %v683, %v699
    %v704 = vtanh.pop %v702
    %v705 = vtanh.pop %v703
    %708 = vrot.lane.b32.xlu0 %v704, 64
    %v709 = vpop.permute.xlu0 %708
    %710 = vrot.lane.b32.xlu0 %v705, 64
    %v711 = vpop.permute.xlu0 %710
    %v714 = vmul.f32 %v671, %v709
    %v715 = vmul.f32 %v673, %v711
    %v718 = vrot.slane %v715, 7
    %vm719 = vcmask 1045509
    %v720 = vsel %vm719, %v718, %v714
    %721 = vrot.lane.b32.xlu0 %v720, 32
    %v722 = vpop.permute.xlu0 %721
    %vm724 = vcmask 259076
    %725 = vst.msk [vmem:[#allocation2 + $0x4] sm:$0x30] %vm724, %v722
    %v726 = vpack.c.bf16 %v714, %v714
    %v727 = vpack.c.bf16 %v715, %v715
    %v730 = vunpack.c.l.b16 %v726
    %v731 = vunpack.c.l.b16 %v727
    %v732 = vrot.slane %v730, 4
    %v733 = vrot.slane %v731, 3
    %v734 = vsel %vm218, %v733, %v732
    %v735 = vpack.c.b16 %v734, %v734
    %736 = vrot.lane.b32.xlu0 %v735, 32
    %v737 = vpop.permute.xlu0 %736
    %v739 = vsel %vm117, %v737, 0
    %741 = vmatprep.subr.bf16.mxu0 0
    %742 = vmatpush1.bf16.msra.mxu0 %v113
    %743 = vmatprep.subr.bf16.mxu0 0
    %744 = vmatpush1.bf16.msra.mxu0 %v114
    %745 = vmatprep.subr.bf16.mxu0 0
    %746 = vmatpush1.bf16.msra.mxu0 0
    %747 = vmatprep.subr.bf16.mxu0 0
    %748 = vmatpush1.bf16.msra.mxu0 0
    %749 = vmatprep.subr.bf16.mxu0 0
    %750 = vmatpush1.bf16.msra.mxu0 0
    %751 = vmatprep.subr.bf16.mxu0 0
    %752 = vmatpush1.bf16.msra.mxu0 0
    %753 = vmatprep.subr.bf16.mxu0 0
    %754 = vmatpush1.bf16.msra.mxu0 0
    %755 = vmatprep.subr.bf16.mxu0 0
    %756 = vmatpush1.bf16.msra.mxu0 0
    %757 = vmatprep.subr.bf16.mxu0 0
    %758 = vmatpush1.bf16.msra.mxu0 0
    %759 = vmatprep.subr.bf16.mxu0 0
    %760 = vmatpush1.bf16.msra.mxu0 0
    %761 = vmatprep.subr.bf16.mxu0 0
    %762 = vmatpush1.bf16.msra.mxu0 0
    %763 = vmatprep.subr.bf16.mxu0 0
    %764 = vmatpush1.bf16.msra.mxu0 0
    %765 = vmatprep.subr.bf16.mxu0 0
    %766 = vmatpush1.bf16.msra.mxu0 0
    %767 = vmatprep.subr.bf16.mxu0 0
    %768 = vmatpush1.bf16.msra.mxu0 0
    %769 = vmatprep.subr.bf16.mxu0 0
    %770 = vmatpush1.bf16.msra.mxu0 0
    %771 = vmatprep.subr.bf16.mxu0 0
    %772 = vmatpush1.bf16.msra.mxu0 0
    %773 = vmatprep.mubr.bf16.mxu0 0
    %774 = vmatmul.mubr.bf16.gmra.mrb[0].mxu0 %v739
    %v775 = vpop.f32.mrb[0].mxu0
    %v776 = vadd.f32 0.0, %v775
    %v777 = vpop.f32.mrb[0].mxu0
    %v778 = vpop.f32.mrb[0].mxu0
    %v779 = vpop.f32.mrb[0].mxu0
    %780 = vdwg.mxu0
    %v782 = vrot.slane %v776, 3
    %v783 = vrot.slane %v776, 4
    %v786 = vadd.f32 %v95, %v782
    %v787 = vadd.f32 %v98, %v783
    %v788 = vxor.u32 %v786, 2147483648
    %v789 = vxor.u32 %v787, 2147483648
    %v790 = vmul.f32 %v788, 1.442695
    %v791 = vpow.pop %v790
    %v792 = vmul.f32 %v789, 1.442695
    %v793 = vpow.pop %v792
    %v794 = vadd.f32 %v791, 1.0
    %v795 = vadd.f32 %v793, 1.0
    %v796 = vrcp.pop %v794
    %v797 = vmul.f32 1.0, %v796
    %v798 = vrcp.pop %v795
    %v799 = vmul.f32 1.0, %v798
    %v800 = vtanh.pop %v786
    %v801 = vtanh.pop %v787
    %v804 = vrot.slane %v702, 7
    %v805 = vrot.slane %v703, 7
    %v808 = vmul.f32 %v797, %v804
    %v809 = vmul.f32 %v799, %v805
    %812 = vrot.lane.b32.xlu0 %v800, 64
    %v813 = vpop.permute.xlu0 %812
    %814 = vrot.lane.b32.xlu0 %v801, 64
    %v815 = vpop.permute.xlu0 %814
    %v818 = vmul.f32 %v797, %v813
    %v819 = vmul.f32 %v799, %v815
    %822 = vrot.lane.b32.xlu0 %v818, 32
    %v823 = vpop.permute.xlu0 %822
    %824 = vrot.lane.b32.xlu0 %v819, 32
    %v825 = vpop.permute.xlu0 %824
    %v828 = vadd.f32 %v808, %v823
    %v829 = vadd.f32 %v809, %v825
    %v830 = vtanh.pop %v828
    %v831 = vtanh.pop %v829
    %834 = vrot.lane.b32.xlu0 %v830, 64
    %v835 = vpop.permute.xlu0 %834
    %836 = vrot.lane.b32.xlu0 %v831, 64
    %v837 = vpop.permute.xlu0 %836
    %v840 = vmul.f32 %v797, %v835
    %v841 = vmul.f32 %v799, %v837
    %v844 = vrot.slane %v841, 7
    %vm845 = vcmask 1046534
    %v846 = vsel %vm845, %v844, %v840
    %847 = vrot.lane.b32.xlu0 %v846, 32
    %v848 = vpop.permute.xlu0 %847
    %vm850 = vcmask 260101
    %851 = vst.msk [vmem:[#allocation2 + $0x5] sm:$0x60] %vm850, %v848
    %v852 = vpack.c.bf16 %v840, %v840
    %v853 = vpack.c.bf16 %v841, %v841
    %v856 = vunpack.c.l.b16 %v852
    %v857 = vunpack.c.l.b16 %v853
    %v858 = vrot.slane %v856, 5
    %v859 = vrot.slane %v857, 4
    %v860 = vsel %vm218, %v859, %v858
    %v861 = vpack.c.b16 %v860, %v860
    %862 = vrot.lane.b32.xlu0 %v861, 32
    %v863 = vpop.permute.xlu0 %862
    %v865 = vsel %vm117, %v863, 0
    %867 = vmatprep.subr.bf16.mxu0 0
    %868 = vmatpush1.bf16.msra.mxu0 %v113
    %869 = vmatprep.subr.bf16.mxu0 0
    %870 = vmatpush1.bf16.msra.mxu0 %v114
    %871 = vmatprep.subr.bf16.mxu0 0
    %872 = vmatpush1.bf16.msra.mxu0 0
    %873 = vmatprep.subr.bf16.mxu0 0
    %874 = vmatpush1.bf16.msra.mxu0 0
    %875 = vmatprep.subr.bf16.mxu0 0
    %876 = vmatpush1.bf16.msra.mxu0 0
    %877 = vmatprep.subr.bf16.mxu0 0
    %878 = vmatpush1.bf16.msra.mxu0 0
    %879 = vmatprep.subr.bf16.mxu0 0
    %880 = vmatpush1.bf16.msra.mxu0 0
    %881 = vmatprep.subr.bf16.mxu0 0
    %882 = vmatpush1.bf16.msra.mxu0 0
    %883 = vmatprep.subr.bf16.mxu0 0
    %884 = vmatpush1.bf16.msra.mxu0 0
    %885 = vmatprep.subr.bf16.mxu0 0
    %886 = vmatpush1.bf16.msra.mxu0 0
    %887 = vmatprep.subr.bf16.mxu0 0
    %888 = vmatpush1.bf16.msra.mxu0 0
    %889 = vmatprep.subr.bf16.mxu0 0
    %890 = vmatpush1.bf16.msra.mxu0 0
    %891 = vmatprep.subr.bf16.mxu0 0
    %892 = vmatpush1.bf16.msra.mxu0 0
    %893 = vmatprep.subr.bf16.mxu0 0
    %894 = vmatpush1.bf16.msra.mxu0 0
    %895 = vmatprep.subr.bf16.mxu0 0
    %896 = vmatpush1.bf16.msra.mxu0 0
    %897 = vmatprep.subr.bf16.mxu0 0
    %898 = vmatpush1.bf16.msra.mxu0 0
    %899 = vmatprep.mubr.bf16.mxu0 0
    %900 = vmatmul.mubr.bf16.gmra.mrb[0].mxu0 %v865
    %v901 = vpop.f32.mrb[0].mxu0
    %v902 = vadd.f32 0.0, %v901
    %v903 = vpop.f32.mrb[0].mxu0
    %v904 = vpop.f32.mrb[0].mxu0
    %v905 = vpop.f32.mrb[0].mxu0
    %906 = vdwg.mxu0
    %v908 = vrot.slane %v902, 2
    %v909 = vrot.slane %v902, 3
    %v912 = vadd.f32 %v95, %v908
    %v913 = vadd.f32 %v98, %v909
    %v914 = vxor.u32 %v912, 2147483648
    %v915 = vxor.u32 %v913, 2147483648
    %v916 = vmul.f32 %v914, 1.442695
    %v917 = vpow.pop %v916
    %v918 = vmul.f32 %v915, 1.442695
    %v919 = vpow.pop %v918
    %v920 = vadd.f32 %v917, 1.0
    %v921 = vadd.f32 %v919, 1.0
    %v922 = vrcp.pop %v920
    %v923 = vmul.f32 1.0, %v922
    %v924 = vrcp.pop %v921
    %v925 = vmul.f32 1.0, %v924
    %v926 = vtanh.pop %v912
    %v927 = vtanh.pop %v913
    %v930 = vrot.slane %v828, 7
    %v931 = vrot.slane %v829, 7
    %v934 = vmul.f32 %v923, %v930
    %v935 = vmul.f32 %v925, %v931
    %938 = vrot.lane.b32.xlu0 %v926, 64
    %v939 = vpop.permute.xlu0 %938
    %940 = vrot.lane.b32.xlu0 %v927, 64
    %v941 = vpop.permute.xlu0 %940
    %v944 = vmul.f32 %v923, %v939
    %v945 = vmul.f32 %v925, %v941
    %948 = vrot.lane.b32.xlu0 %v944, 32
    %v949 = vpop.permute.xlu0 %948
    %950 = vrot.lane.b32.xlu0 %v945, 32
    %v951 = vpop.permute.xlu0 %950
    %v954 = vadd.f32 %v934, %v949
    %v955 = vadd.f32 %v935, %v951
    %v956 = vtanh.pop %v954
    %v957 = vtanh.pop %v955
    %960 = vrot.lane.b32.xlu0 %v956, 64
    %v961 = vpop.permute.xlu0 %960
    %962 = vrot.lane.b32.xlu0 %v957, 64
    %v963 = vpop.permute.xlu0 %962
    %v966 = vmul.f32 %v923, %v961
    %v967 = vmul.f32 %v925, %v963
    %v970 = vrot.slane %v967, 7
    %vm971 = vcmask 1047559
    %v972 = vsel %vm971, %v970, %v966
    %973 = vrot.lane.b32.xlu0 %v972, 32
    %v974 = vpop.permute.xlu0 %973
    %vm976 = vcmask 261126
    %977 = vst.msk [vmem:[#allocation2 + $0x6] sm:$0xc0] %vm976, %v974
    %v978 = vpack.c.bf16 %v966, %v966
    %v979 = vpack.c.bf16 %v967, %v967
    %v982 = vunpack.c.l.b16 %v978
    %v983 = vunpack.c.l.b16 %v979
    %v984 = vrot.slane %v982, 6
    %v985 = vrot.slane %v983, 5
    %v986 = vsel %vm218, %v985, %v984
    %v987 = vpack.c.b16 %v986, %v986
    %988 = vrot.lane.b32.xlu0 %v987, 32
    %v989 = vpop.permute.xlu0 %988
    %v991 = vsel %vm117, %v989, 0
    %993 = vmatprep.subr.bf16.mxu0 0
    %994 = vmatpush1.bf16.msra.mxu0 %v113
    %995 = vmatprep.subr.bf16.mxu0 0
    %996 = vmatpush1.bf16.msra.mxu0 %v114
    %997 = vmatprep.subr.bf16.mxu0 0
    %998 = vmatpush1.bf16.msra.mxu0 0
    %999 = vmatprep.subr.bf16.mxu0 0
    %1000 = vmatpush1.bf16.msra.mxu0 0
    %1001 = vmatprep.subr.bf16.mxu0 0
    %1002 = vmatpush1.bf16.msra.mxu0 0
    %1003 = vmatprep.subr.bf16.mxu0 0
    %1004 = vmatpush1.bf16.msra.mxu0 0
    %1005 = vmatprep.subr.bf16.mxu0 0
    %1006 = vmatpush1.bf16.msra.mxu0 0
    %1007 = vmatprep.subr.bf16.mxu0 0
    %1008 = vmatpush1.bf16.msra.mxu0 0
    %1009 = vmatprep.subr.bf16.mxu0 0
    %1010 = vmatpush1.bf16.msra.mxu0 0
    %1011 = vmatprep.subr.bf16.mxu0 0
    %1012 = vmatpush1.bf16.msra.mxu0 0
    %1013 = vmatprep.subr.bf16.mxu0 0
    %1014 = vmatpush1.bf16.msra.mxu0 0
    %1015 = vmatprep.subr.bf16.mxu0 0
    %1016 = vmatpush1.bf16.msra.mxu0 0
    %1017 = vmatprep.subr.bf16.mxu0 0
    %1018 = vmatpush1.bf16.msra.mxu0 0
    %1019 = vmatprep.subr.bf16.mxu0 0
    %1020 = vmatpush1.bf16.msra.mxu0 0
    %1021 = vmatprep.subr.bf16.mxu0 0
    %1022 = vmatpush1.bf16.msra.mxu0 0
    %1023 = vmatprep.subr.bf16.mxu0 0
    %1024 = vmatpush1.bf16.msra.mxu0 0
    %1025 = vmatprep.mubr.bf16.mxu0 0
    %1026 = vmatmul.mubr.bf16.gmra.mrb[0].mxu0 %v991
    %v1027 = vpop.f32.mrb[0].mxu0
    %v1028 = vadd.f32 0.0, %v1027
    %v1029 = vpop.f32.mrb[0].mxu0
    %v1030 = vpop.f32.mrb[0].mxu0
    %v1031 = vpop.f32.mrb[0].mxu0
    %1032 = vdwg.mxu0
    %v1034 = vrot.slane %v1028, 1
    %v1035 = vrot.slane %v1028, 2
    %v1038 = vadd.f32 %v95, %v1034
    %v1039 = vadd.f32 %v98, %v1035
    %v1040 = vxor.u32 %v1038, 2147483648
    %v1041 = vxor.u32 %v1039, 2147483648
    %v1042 = vmul.f32 %v1040, 1.442695
    %v1043 = vpow.pop %v1042
    %v1044 = vmul.f32 %v1041, 1.442695
    %v1045 = vpow.pop %v1044
    %v1046 = vadd.f32 %v1043, 1.0
    %v1047 = vadd.f32 %v1045, 1.0
    %v1048 = vrcp.pop %v1046
    %v1049 = vmul.f32 1.0, %v1048
    %v1050 = vrcp.pop %v1047
    %v1051 = vmul.f32 1.0, %v1050
    %v1052 = vtanh.pop %v1038
    %v1053 = vtanh.pop %v1039
    %v1056 = vrot.slane %v954, 7
    %v1057 = vrot.slane %v955, 7
    %v1060 = vmul.f32 %v1049, %v1056
    %v1061 = vmul.f32 %v1051, %v1057
    %1064 = vrot.lane.b32.xlu0 %v1052, 64
    %v1065 = vpop.permute.xlu0 %1064
    %1066 = vrot.lane.b32.xlu0 %v1053, 64
    %v1067 = vpop.permute.xlu0 %1066
    %v1070 = vmul.f32 %v1049, %v1065
    %v1071 = vmul.f32 %v1051, %v1067
    %1074 = vrot.lane.b32.xlu0 %v1070, 32
    %v1075 = vpop.permute.xlu0 %1074
    %1076 = vrot.lane.b32.xlu0 %v1071, 32
    %v1077 = vpop.permute.xlu0 %1076
    %v1080 = vadd.f32 %v1060, %v1075
    %v1081 = vadd.f32 %v1061, %v1077
    %v1082 = vtanh.pop %v1080
    %v1083 = vtanh.pop %v1081
    %1086 = vrot.lane.b32.xlu0 %v1082, 64
    %v1087 = vpop.permute.xlu0 %1086
    %1088 = vrot.lane.b32.xlu0 %v1083, 64
    %v1089 = vpop.permute.xlu0 %1088
    %v1092 = vmul.f32 %v1049, %v1087
    %v1093 = vmul.f32 %v1051, %v1089
    %v1096 = vrot.slane %v1093, 7
    %1097 = vrot.lane.b32.xlu0 %v1092, 32
    %v1098 = vpop.permute.xlu0 %1097
    %1099 = vrot.lane.b32.xlu0 %v1096, 32
    %v1100 = vpop.permute.xlu0 %1099
    %vm1103 = vcmask 261127
    %1104 = vst.msk [vmem:[#allocation2 + $0x7] sm:$0x80] %vm1103, %v1098
    %vm1105 = vcmask 253952
    %1106 = vst.msk [vmem:[#allocation2 + $0xf] sm:$0x1] %vm1105, %v1100
    %v1107 = vld [vmem:[#allocation2] sm:$0xff]
    %v1108 = vld [vmem:[#allocation2 + $0x8] sm:$0xff]
    %v1109 = vpack.c.bf16 %v1108, %v1107
    %v1110 = vld [vmem:[%s4] sm:$0xf]
    %v1111 = vld [vmem:[%s4 + $0x4] sm:$0xf]
    %v1112 = vld [vmem:[%s4 + $0x8] sm:$0xf]
    %v1113 = vld [vmem:[%s4 + $0xc] sm:$0xf]
    %v1114 = vld [vmem:[%s6] sm:$0x1]
    %v1116 = vlaneseq
    %v1117 = vshrl.u32 %v1116, 7
    %v1118 = vsub.s32 0, %v1117
    %v1119 = vrot.slane %v1114, %v1118
    %v1125 = vunpack.c.l.b16 %v1110
    %v1126 = vunpack.c.l.b16 %v1111
    %v1127 = vunpack.c.l.b16 %v1112
    %v1128 = vunpack.c.l.b16 %v1113
    %v1129 = vpack.c.b16 %v1126, %v1125
    %v1130 = vpack.c.b16 %v1128, %v1127
    %v1134 = vsel %vm117, %v1109, 0
    %1136 = vmatprep.subr.bf16.mxu0 0
    %1137 = vmatpush1.bf16.msra.mxu0 %v1129
    %1138 = vmatprep.subr.bf16.mxu0 0
    %1139 = vmatpush1.bf16.msra.mxu0 %v1130
    %1140 = vmatprep.subr.bf16.mxu0 0
    %1141 = vmatpush1.bf16.msra.mxu0 0
    %1142 = vmatprep.subr.bf16.mxu0 0
    %1143 = vmatpush1.bf16.msra.mxu0 0
    %1144 = vmatprep.subr.bf16.mxu0 0
    %1145 = vmatpush1.bf16.msra.mxu0 0
    %1146 = vmatprep.subr.bf16.mxu0 0
    %1147 = vmatpush1.bf16.msra.mxu0 0
    %1148 = vmatprep.subr.bf16.mxu0 0
    %1149 = vmatpush1.bf16.msra.mxu0 0
    %1150 = vmatprep.subr.bf16.mxu0 0
    %1151 = vmatpush1.bf16.msra.mxu0 0
    %1152 = vmatprep.subr.bf16.mxu0 0
    %1153 = vmatpush1.bf16.msra.mxu0 0
    %1154 = vmatprep.subr.bf16.mxu0 0
    %1155 = vmatpush1.bf16.msra.mxu0 0
    %1156 = vmatprep.subr.bf16.mxu0 0
    %1157 = vmatpush1.bf16.msra.mxu0 0
    %1158 = vmatprep.subr.bf16.mxu0 0
    %1159 = vmatpush1.bf16.msra.mxu0 0
    %1160 = vmatprep.subr.bf16.mxu0 0
    %1161 = vmatpush1.bf16.msra.mxu0 0
    %1162 = vmatprep.subr.bf16.mxu0 0
    %1163 = vmatpush1.bf16.msra.mxu0 0
    %1164 = vmatprep.subr.bf16.mxu0 0
    %1165 = vmatpush1.bf16.msra.mxu0 0
    %1166 = vmatprep.subr.bf16.mxu0 0
    %1167 = vmatpush1.bf16.msra.mxu0 0
    %1168 = vmatprep.mubr.bf16.mxu0 0
    %1169 = vmatmul.mubr.bf16.gmra.mrb[0].mxu0 %v1134
    %v1170 = vpop.f32.mrb[0].mxu0
    %v1171 = vadd.f32 %v1119, %v1170
    %v1172 = vpop.f32.mrb[0].mxu0
    %v1173 = vpop.f32.mrb[0].mxu0
    %v1174 = vadd.f32 %v1119, %v1173
    %v1175 = vpop.f32.mrb[0].mxu0
    %1176 = vdwg.mxu0
    %v1177 = vld [vmem:[%s5] sm:$0xf]
    %v1178 = vld [vmem:[%s5 + $0x4] sm:$0xf]
    %v1179 = vld [vmem:[%s5 + $0x8] sm:$0xf]
    %v1180 = vld [vmem:[%s5 + $0xc] sm:$0xf]
    %v1185 = vunpack.c.l.b16 %v1177
    %v1186 = vunpack.c.l.b16 %v1178
    %v1187 = vunpack.c.l.b16 %v1179
    %v1188 = vunpack.c.l.b16 %v1180
    %v1189 = vpack.c.b16 %v1186, %v1185
    %v1190 = vpack.c.b16 %v1188, %v1187
    %1193 = vmatprep.subr.bf16.mxu0 0
    %1194 = vmatpush1.bf16.msra.mxu0 %v1189
    %1195 = vmatprep.subr.bf16.mxu0 0
    %1196 = vmatpush1.bf16.msra.mxu0 %v1190
    %1197 = vmatprep.subr.bf16.mxu0 0
    %1198 = vmatpush1.bf16.msra.mxu0 0
    %1199 = vmatprep.subr.bf16.mxu0 0
    %1200 = vmatpush1.bf16.msra.mxu0 0
    %1201 = vmatprep.subr.bf16.mxu0 0
    %1202 = vmatpush1.bf16.msra.mxu0 0
    %1203 = vmatprep.subr.bf16.mxu0 0
    %1204 = vmatpush1.bf16.msra.mxu0 0
    %1205 = vmatprep.subr.bf16.mxu0 0
    %1206 = vmatpush1.bf16.msra.mxu0 0
    %1207 = vmatprep.subr.bf16.mxu0 0
    %1208 = vmatpush1.bf16.msra.mxu0 0
    %1209 = vmatprep.subr.bf16.mxu0 0
    %1210 = vmatpush1.bf16.msra.mxu0 0
    %1211 = vmatprep.subr.bf16.mxu0 0
    %1212 = vmatpush1.bf16.msra.mxu0 0
    %1213 = vmatprep.subr.bf16.mxu0 0
    %1214 = vmatpush1.bf16.msra.mxu0 0
    %1215 = vmatprep.subr.bf16.mxu0 0
    %1216 = vmatpush1.bf16.msra.mxu0 0
    %1217 = vmatprep.subr.bf16.mxu0 0
    %1218 = vmatpush1.bf16.msra.mxu0 0
    %1219 = vmatprep.subr.bf16.mxu0 0
    %1220 = vmatpush1.bf16.msra.mxu0 0
    %1221 = vmatprep.subr.bf16.mxu0 0
    %1222 = vmatpush1.bf16.msra.mxu0 0
    %1223 = vmatprep.subr.bf16.mxu0 0
    %1224 = vmatpush1.bf16.msra.mxu0 0
    %1225 = vmatprep.mubr.bf16.mxu0 0
    %1226 = vmatmul.mubr.bf16.gmra.mrb[0].mxu0 %v119
    %v1227 = vpop.f32.mrb[0].mxu0
    %v1228 = vadd.f32 0.0, %v1227
    %v1229 = vpop.f32.mrb[0].mxu0
    %v1230 = vpop.f32.mrb[0].mxu0
    %v1231 = vpop.f32.mrb[0].mxu0
    %1232 = vdwg.mxu0
    %v1233 = vadd.f32 %v1171, %v1228
    %v1234 = vxor.u32 %v1233, 2147483648
    %v1235 = vmul.f32 %v1234, 1.442695
    %v1236 = vpow.pop %v1235
    %v1237 = vadd.f32 %v1236, 1.0
    %v1238 = vrcp.pop %v1237
    %v1239 = vmul.f32 1.0, %v1238
    %v1240 = vtanh.pop %v1233
    %v1241 = vmul.f32 %v1239, 0.0
    %1243 = vrot.lane.b32.xlu0 %v1240, 64
    %v1244 = vpop.permute.xlu0 %1243
    %v1246 = vmul.f32 %v1239, %v1244
    %1248 = vrot.lane.b32.xlu0 %v1246, 32
    %v1249 = vpop.permute.xlu0 %1248
    %v1251 = vadd.f32 %v1241, %v1249
    %v1252 = vtanh.pop %v1251
    %1254 = vrot.lane.b32.xlu0 %v1252, 64
    %v1255 = vpop.permute.xlu0 %1254
    %v1257 = vmul.f32 %v1239, %v1255
    %v1258 = vpack.c.bf16 %v1257, %v1257
    %1260 = vrot.lane.b32.xlu0 %v1258, 32
    %v1261 = vpop.permute.xlu0 %1260
    %v1263 = vsel %vm117, %v1261, 0
    %1265 = vmatprep.subr.bf16.mxu0 0
    %1266 = vmatpush1.bf16.msra.mxu0 %v1189
    %1267 = vmatprep.subr.bf16.mxu0 0
    %1268 = vmatpush1.bf16.msra.mxu0 %v1190
    %1269 = vmatprep.subr.bf16.mxu0 0
    %1270 = vmatpush1.bf16.msra.mxu0 0
    %1271 = vmatprep.subr.bf16.mxu0 0
    %1272 = vmatpush1.bf16.msra.mxu0 0
    %1273 = vmatprep.subr.bf16.mxu0 0
    %1274 = vmatpush1.bf16.msra.mxu0 0
    %1275 = vmatprep.subr.bf16.mxu0 0
    %1276 = vmatpush1.bf16.msra.mxu0 0
    %1277 = vmatprep.subr.bf16.mxu0 0
    %1278 = vmatpush1.bf16.msra.mxu0 0
    %1279 = vmatprep.subr.bf16.mxu0 0
    %1280 = vmatpush1.bf16.msra.mxu0 0
    %1281 = vmatprep.subr.bf16.mxu0 0
    %1282 = vmatpush1.bf16.msra.mxu0 0
    %1283 = vmatprep.subr.bf16.mxu0 0
    %1284 = vmatpush1.bf16.msra.mxu0 0
    %1285 = vmatprep.subr.bf16.mxu0 0
    %1286 = vmatpush1.bf16.msra.mxu0 0
    %1287 = vmatprep.subr.bf16.mxu0 0
    %1288 = vmatpush1.bf16.msra.mxu0 0
    %1289 = vmatprep.subr.bf16.mxu0 0
    %1290 = vmatpush1.bf16.msra.mxu0 0
    %1291 = vmatprep.subr.bf16.mxu0 0
    %1292 = vmatpush1.bf16.msra.mxu0 0
    %1293 = vmatprep.subr.bf16.mxu0 0
    %1294 = vmatpush1.bf16.msra.mxu0 0
    %1295 = vmatprep.subr.bf16.mxu0 0
    %1296 = vmatpush1.bf16.msra.mxu0 0
    %1297 = vmatprep.mubr.bf16.mxu0 0
    %1298 = vmatmul.mubr.bf16.gmra.mrb[0].mxu0 %v1263
    %v1299 = vpop.f32.mrb[0].mxu0
    %v1300 = vadd.f32 0.0, %v1299
    %v1301 = vpop.f32.mrb[0].mxu0
    %v1302 = vpop.f32.mrb[0].mxu0
    %v1303 = vpop.f32.mrb[0].mxu0
    %1304 = vdwg.mxu0
    %v1306 = vrot.slane %v1300, 6
    %v1308 = vadd.f32 %v1171, %v1306
    %v1309 = vxor.u32 %v1308, 2147483648
    %v1310 = vmul.f32 %v1309, 1.442695
    %v1311 = vpow.pop %v1310
    %v1312 = vadd.f32 %v1311, 1.0
    %v1313 = vrcp.pop %v1312
    %v1314 = vmul.f32 1.0, %v1313
    %v1315 = vtanh.pop %v1308
    %v1317 = vrot.slane %v1251, 6
    %v1319 = vmul.f32 %v1314, %v1317
    %1321 = vrot.lane.b32.xlu0 %v1315, 64
    %v1322 = vpop.permute.xlu0 %1321
    %v1324 = vmul.f32 %v1314, %v1322
    %1326 = vrot.lane.b32.xlu0 %v1324, 32
    %v1327 = vpop.permute.xlu0 %1326
    %v1329 = vadd.f32 %v1319, %v1327
    %v1330 = vtanh.pop %v1329
    %1332 = vrot.lane.b32.xlu0 %v1330, 64
    %v1333 = vpop.permute.xlu0 %1332
    %v1335 = vmul.f32 %v1314, %v1333
    %v1336 = vpack.c.bf16 %v1335, %v1335
    %v1338 = vrot.slane %v1336, 1
    %1339 = vrot.lane.b32.xlu0 %v1338, 32
    %v1340 = vpop.permute.xlu0 %1339
    %v1342 = vsel %vm117, %v1340, 0
    %1344 = vmatprep.subr.bf16.mxu0 0
    %1345 = vmatpush1.bf16.msra.mxu0 %v1189
    %1346 = vmatprep.subr.bf16.mxu0 0
    %1347 = vmatpush1.bf16.msra.mxu0 %v1190
    %1348 = vmatprep.subr.bf16.mxu0 0
    %1349 = vmatpush1.bf16.msra.mxu0 0
    %1350 = vmatprep.subr.bf16.mxu0 0
    %1351 = vmatpush1.bf16.msra.mxu0 0
    %1352 = vmatprep.subr.bf16.mxu0 0
    %1353 = vmatpush1.bf16.msra.mxu0 0
    %1354 = vmatprep.subr.bf16.mxu0 0
    %1355 = vmatpush1.bf16.msra.mxu0 0
    %1356 = vmatprep.subr.bf16.mxu0 0
    %1357 = vmatpush1.bf16.msra.mxu0 0
    %1358 = vmatprep.subr.bf16.mxu0 0
    %1359 = vmatpush1.bf16.msra.mxu0 0
    %1360 = vmatprep.subr.bf16.mxu0 0
    %1361 = vmatpush1.bf16.msra.mxu0 0
    %1362 = vmatprep.subr.bf16.mxu0 0
    %1363 = vmatpush1.bf16.msra.mxu0 0
    %1364 = vmatprep.subr.bf16.mxu0 0
    %1365 = vmatpush1.bf16.msra.mxu0 0
    %1366 = vmatprep.subr.bf16.mxu0 0
    %1367 = vmatpush1.bf16.msra.mxu0 0
    %1368 = vmatprep.subr.bf16.mxu0 0
    %1369 = vmatpush1.bf16.msra.mxu0 0
    %1370 = vmatprep.subr.bf16.mxu0 0
    %1371 = vmatpush1.bf16.msra.mxu0 0
    %1372 = vmatprep.subr.bf16.mxu0 0
    %1373 = vmatpush1.bf16.msra.mxu0 0
    %1374 = vmatprep.subr.bf16.mxu0 0
    %1375 = vmatpush1.bf16.msra.mxu0 0
    %1376 = vmatprep.mubr.bf16.mxu0 0
    %1377 = vmatmul.mubr.bf16.gmra.mrb[0].mxu0 %v1342
    %v1378 = vpop.f32.mrb[0].mxu0
    %v1379 = vadd.f32 0.0, %v1378
    %v1380 = vpop.f32.mrb[0].mxu0
    %v1381 = vpop.f32.mrb[0].mxu0
    %v1382 = vpop.f32.mrb[0].mxu0
    %1383 = vdwg.mxu0
    %v1385 = vrot.slane %v1379, 4
    %v1387 = vadd.f32 %v1171, %v1385
    %v1388 = vxor.u32 %v1387, 2147483648
    %v1389 = vmul.f32 %v1388, 1.442695
    %v1390 = vpow.pop %v1389
    %v1391 = vadd.f32 %v1390, 1.0
    %v1392 = vrcp.pop %v1391
    %v1393 = vmul.f32 1.0, %v1392
    %v1394 = vtanh.pop %v1387
    %v1396 = vrot.slane %v1329, 6
    %v1398 = vmul.f32 %v1393, %v1396
    %1400 = vrot.lane.b32.xlu0 %v1394, 64
    %v1401 = vpop.permute.xlu0 %1400
    %v1403 = vmul.f32 %v1393, %v1401
    %1405 = vrot.lane.b32.xlu0 %v1403, 32
    %v1406 = vpop.permute.xlu0 %1405
    %v1408 = vadd.f32 %v1398, %v1406
    %v1409 = vtanh.pop %v1408
    %1411 = vrot.lane.b32.xlu0 %v1409, 64
    %v1412 = vpop.permute.xlu0 %1411
    %v1414 = vmul.f32 %v1393, %v1412
    %v1415 = vpack.c.bf16 %v1414, %v1414
    %v1417 = vrot.slane %v1415, 2
    %1418 = vrot.lane.b32.xlu0 %v1417, 32
    %v1419 = vpop.permute.xlu0 %1418
    %v1421 = vsel %vm117, %v1419, 0
    %1423 = vmatprep.subr.bf16.mxu0 0
    %1424 = vmatpush1.bf16.msra.mxu0 %v1189
    %1425 = vmatprep.subr.bf16.mxu0 0
    %1426 = vmatpush1.bf16.msra.mxu0 %v1190
    %1427 = vmatprep.subr.bf16.mxu0 0
    %1428 = vmatpush1.bf16.msra.mxu0 0
    %1429 = vmatprep.subr.bf16.mxu0 0
    %1430 = vmatpush1.bf16.msra.mxu0 0
    %1431 = vmatprep.subr.bf16.mxu0 0
    %1432 = vmatpush1.bf16.msra.mxu0 0
    %1433 = vmatprep.subr.bf16.mxu0 0
    %1434 = vmatpush1.bf16.msra.mxu0 0
    %1435 = vmatprep.subr.bf16.mxu0 0
    %1436 = vmatpush1.bf16.msra.mxu0 0
    %1437 = vmatprep.subr.bf16.mxu0 0
    %1438 = vmatpush1.bf16.msra.mxu0 0
    %1439 = vmatprep.subr.bf16.mxu0 0
    %1440 = vmatpush1.bf16.msra.mxu0 0
    %1441 = vmatprep.subr.bf16.mxu0 0
    %1442 = vmatpush1.bf16.msra.mxu0 0
    %1443 = vmatprep.subr.bf16.mxu0 0
    %1444 = vmatpush1.bf16.msra.mxu0 0
    %1445 = vmatprep.subr.bf16.mxu0 0
    %1446 = vmatpush1.bf16.msra.mxu0 0
    %1447 = vmatprep.subr.bf16.mxu0 0
    %1448 = vmatpush1.bf16.msra.mxu0 0
    %1449 = vmatprep.subr.bf16.mxu0 0
    %1450 = vmatpush1.bf16.msra.mxu0 0
    %1451 = vmatprep.subr.bf16.mxu0 0
    %1452 = vmatpush1.bf16.msra.mxu0 0
    %1453 = vmatprep.subr.bf16.mxu0 0
    %1454 = vmatpush1.bf16.msra.mxu0 0
    %1455 = vmatprep.mubr.bf16.mxu0 0
    %1456 = vmatmul.mubr.bf16.gmra.mrb[0].mxu0 %v1421
    %v1457 = vpop.f32.mrb[0].mxu0
    %v1458 = vadd.f32 0.0, %v1457
    %v1459 = vpop.f32.mrb[0].mxu0
    %v1460 = vpop.f32.mrb[0].mxu0
    %v1461 = vpop.f32.mrb[0].mxu0
    %1462 = vdwg.mxu0
    %v1464 = vrot.slane %v1458, 2
    %v1466 = vadd.f32 %v1171, %v1464
    %v1467 = vxor.u32 %v1466, 2147483648
    %v1468 = vmul.f32 %v1467, 1.442695
    %v1469 = vpow.pop %v1468
    %v1470 = vadd.f32 %v1469, 1.0
    %v1471 = vrcp.pop %v1470
    %v1472 = vmul.f32 1.0, %v1471
    %v1473 = vtanh.pop %v1466
    %v1475 = vrot.slane %v1408, 6
    %v1477 = vmul.f32 %v1472, %v1475
    %1479 = vrot.lane.b32.xlu0 %v1473, 64
    %v1480 = vpop.permute.xlu0 %1479
    %v1482 = vmul.f32 %v1472, %v1480
    %1484 = vrot.lane.b32.xlu0 %v1482, 32
    %v1485 = vpop.permute.xlu0 %1484
    %v1487 = vadd.f32 %v1477, %v1485
    %v1488 = vtanh.pop %v1487
    %1490 = vrot.lane.b32.xlu0 %v1488, 64
    %v1491 = vpop.permute.xlu0 %1490
    %v1493 = vmul.f32 %v1472, %v1491
    %v1494 = vpack.c.bf16 %v1493, %v1493
    %v1496 = vrot.slane %v1494, 3
    %1497 = vrot.lane.b32.xlu0 %v1496, 32
    %v1498 = vpop.permute.xlu0 %1497
    %v1500 = vsel %vm117, %v1498, 0
    %1502 = vmatprep.subr.bf16.mxu0 0
    %1503 = vmatpush1.bf16.msra.mxu0 %v1189
    %1504 = vmatprep.subr.bf16.mxu0 0
    %1505 = vmatpush1.bf16.msra.mxu0 %v1190
    %1506 = vmatprep.subr.bf16.mxu0 0
    %1507 = vmatpush1.bf16.msra.mxu0 0
    %1508 = vmatprep.subr.bf16.mxu0 0
    %1509 = vmatpush1.bf16.msra.mxu0 0
    %1510 = vmatprep.subr.bf16.mxu0 0
    %1511 = vmatpush1.bf16.msra.mxu0 0
    %1512 = vmatprep.subr.bf16.mxu0 0
    %1513 = vmatpush1.bf16.msra.mxu0 0
    %1514 = vmatprep.subr.bf16.mxu0 0
    %1515 = vmatpush1.bf16.msra.mxu0 0
    %1516 = vmatprep.subr.bf16.mxu0 0
    %1517 = vmatpush1.bf16.msra.mxu0 0
    %1518 = vmatprep.subr.bf16.mxu0 0
    %1519 = vmatpush1.bf16.msra.mxu0 0
    %1520 = vmatprep.subr.bf16.mxu0 0
    %1521 = vmatpush1.bf16.msra.mxu0 0
    %1522 = vmatprep.subr.bf16.mxu0 0
    %1523 = vmatpush1.bf16.msra.mxu0 0
    %1524 = vmatprep.subr.bf16.mxu0 0
    %1525 = vmatpush1.bf16.msra.mxu0 0
    %1526 = vmatprep.subr.bf16.mxu0 0
    %1527 = vmatpush1.bf16.msra.mxu0 0
    %1528 = vmatprep.subr.bf16.mxu0 0
    %1529 = vmatpush1.bf16.msra.mxu0 0
    %1530 = vmatprep.subr.bf16.mxu0 0
    %1531 = vmatpush1.bf16.msra.mxu0 0
    %1532 = vmatprep.subr.bf16.mxu0 0
    %1533 = vmatpush1.bf16.msra.mxu0 0
    %1534 = vmatprep.mubr.bf16.mxu0 0
    %1535 = vmatmul.mubr.bf16.gmra.mrb[0].mxu0 %v1500
    %v1536 = vpop.f32.mrb[0].mxu0
    %v1537 = vadd.f32 0.0, %v1536
    %v1538 = vpop.f32.mrb[0].mxu0
    %v1539 = vpop.f32.mrb[0].mxu0
    %v1540 = vpop.f32.mrb[0].mxu0
    %1541 = vdwg.mxu0
    %v1542 = vadd.f32 %v1174, %v1537
    %v1543 = vxor.u32 %v1542, 2147483648
    %v1544 = vmul.f32 %v1543, 1.442695
    %v1545 = vpow.pop %v1544
    %v1546 = vadd.f32 %v1545, 1.0
    %v1547 = vrcp.pop %v1546
    %v1548 = vmul.f32 1.0, %v1547
    %v1549 = vtanh.pop %v1542
    %v1551 = vrot.slane %v1487, 6
    %v1553 = vmul.f32 %v1548, %v1551
    %1555 = vrot.lane.b32.xlu0 %v1549, 64
    %v1556 = vpop.permute.xlu0 %1555
    %v1558 = vmul.f32 %v1548, %v1556
    %1560 = vrot.lane.b32.xlu0 %v1558, 32
    %v1561 = vpop.permute.xlu0 %1560
    %v1563 = vadd.f32 %v1553, %v1561
    %v1564 = vtanh.pop %v1563
    %1566 = vrot.lane.b32.xlu0 %v1564, 64
    %v1567 = vpop.permute.xlu0 %1566
    %v1569 = vmul.f32 %v1548, %v1567
    %v1570 = vpack.c.bf16 %v1569, %v1569
    %1572 = vrot.lane.b32.xlu0 %v1570, 32
    %v1573 = vpop.permute.xlu0 %1572
    %v1575 = vsel %vm117, %v1573, 0
    %1577 = vmatprep.subr.bf16.mxu0 0
    %1578 = vmatpush1.bf16.msra.mxu0 %v1189
    %1579 = vmatprep.subr.bf16.mxu0 0
    %1580 = vmatpush1.bf16.msra.mxu0 %v1190
    %1581 = vmatprep.subr.bf16.mxu0 0
    %1582 = vmatpush1.bf16.msra.mxu0 0
    %1583 = vmatprep.subr.bf16.mxu0 0
    %1584 = vmatpush1.bf16.msra.mxu0 0
    %1585 = vmatprep.subr.bf16.mxu0 0
    %1586 = vmatpush1.bf16.msra.mxu0 0
    %1587 = vmatprep.subr.bf16.mxu0 0
    %1588 = vmatpush1.bf16.msra.mxu0 0
    %1589 = vmatprep.subr.bf16.mxu0 0
    %1590 = vmatpush1.bf16.msra.mxu0 0
    %1591 = vmatprep.subr.bf16.mxu0 0
    %1592 = vmatpush1.bf16.msra.mxu0 0
    %1593 = vmatprep.subr.bf16.mxu0 0
    %1594 = vmatpush1.bf16.msra.mxu0 0
    %1595 = vmatprep.subr.bf16.mxu0 0
    %1596 = vmatpush1.bf16.msra.mxu0 0
    %1597 = vmatprep.subr.bf16.mxu0 0
    %1598 = vmatpush1.bf16.msra.mxu0 0
    %1599 = vmatprep.subr.bf16.mxu0 0
    %1600 = vmatpush1.bf16.msra.mxu0 0
    %1601 = vmatprep.subr.bf16.mxu0 0
    %1602 = vmatpush1.bf16.msra.mxu0 0
    %1603 = vmatprep.subr.bf16.mxu0 0
    %1604 = vmatpush1.bf16.msra.mxu0 0
    %1605 = vmatprep.subr.bf16.mxu0 0
    %1606 = vmatpush1.bf16.msra.mxu0 0
    %1607 = vmatprep.subr.bf16.mxu0 0
    %1608 = vmatpush1.bf16.msra.mxu0 0
    %1609 = vmatprep.mubr.bf16.mxu0 0
    %1610 = vmatmul.mubr.bf16.gmra.mrb[0].mxu0 %v1575
    %v1611 = vpop.f32.mrb[0].mxu0
    %v1612 = vadd.f32 0.0, %v1611
    %v1613 = vpop.f32.mrb[0].mxu0
    %v1614 = vpop.f32.mrb[0].mxu0
    %v1615 = vpop.f32.mrb[0].mxu0
    %1616 = vdwg.mxu0
    %v1618 = vrot.slane %v1612, 6
    %v1620 = vadd.f32 %v1174, %v1618
    %v1621 = vxor.u32 %v1620, 2147483648
    %v1622 = vmul.f32 %v1621, 1.442695
    %v1623 = vpow.pop %v1622
    %v1624 = vadd.f32 %v1623, 1.0
    %v1625 = vrcp.pop %v1624
    %v1626 = vmul.f32 1.0, %v1625
    %v1627 = vtanh.pop %v1620
    %v1629 = vrot.slane %v1563, 6
    %v1631 = vmul.f32 %v1626, %v1629
    %1633 = vrot.lane.b32.xlu0 %v1627, 64
    %v1634 = vpop.permute.xlu0 %1633
    %v1636 = vmul.f32 %v1626, %v1634
    %1638 = vrot.lane.b32.xlu0 %v1636, 32
    %v1639 = vpop.permute.xlu0 %1638
    %v1641 = vadd.f32 %v1631, %v1639
    %v1642 = vtanh.pop %v1641
    %1644 = vrot.lane.b32.xlu0 %v1642, 64
    %v1645 = vpop.permute.xlu0 %1644
    %v1647 = vmul.f32 %v1626, %v1645
    %v1648 = vpack.c.bf16 %v1647, %v1647
    %v1650 = vrot.slane %v1648, 1
    %1651 = vrot.lane.b32.xlu0 %v1650, 32
    %v1652 = vpop.permute.xlu0 %1651
    %v1654 = vsel %vm117, %v1652, 0
    %1656 = vmatprep.subr.bf16.mxu0 0
    %1657 = vmatpush1.bf16.msra.mxu0 %v1189
    %1658 = vmatprep.subr.bf16.mxu0 0
    %1659 = vmatpush1.bf16.msra.mxu0 %v1190
    %1660 = vmatprep.subr.bf16.mxu0 0
    %1661 = vmatpush1.bf16.msra.mxu0 0
    %1662 = vmatprep.subr.bf16.mxu0 0
    %1663 = vmatpush1.bf16.msra.mxu0 0
    %1664 = vmatprep.subr.bf16.mxu0 0
    %1665 = vmatpush1.bf16.msra.mxu0 0
    %1666 = vmatprep.subr.bf16.mxu0 0
    %1667 = vmatpush1.bf16.msra.mxu0 0
    %1668 = vmatprep.subr.bf16.mxu0 0
    %1669 = vmatpush1.bf16.msra.mxu0 0
    %1670 = vmatprep.subr.bf16.mxu0 0
    %1671 = vmatpush1.bf16.msra.mxu0 0
    %1672 = vmatprep.subr.bf16.mxu0 0
    %1673 = vmatpush1.bf16.msra.mxu0 0
    %1674 = vmatprep.subr.bf16.mxu0 0
    %1675 = vmatpush1.bf16.msra.mxu0 0
    %1676 = vmatprep.subr.bf16.mxu0 0
    %1677 = vmatpush1.bf16.msra.mxu0 0
    %1678 = vmatprep.subr.bf16.mxu0 0
    %1679 = vmatpush1.bf16.msra.mxu0 0
    %1680 = vmatprep.subr.bf16.mxu0 0
    %1681 = vmatpush1.bf16.msra.mxu0 0
    %1682 = vmatprep.subr.bf16.mxu0 0
    %1683 = vmatpush1.bf16.msra.mxu0 0
    %1684 = vmatprep.subr.bf16.mxu0 0
    %1685 = vmatpush1.bf16.msra.mxu0 0
    %1686 = vmatprep.subr.bf16.mxu0 0
    %1687 = vmatpush1.bf16.msra.mxu0 0
    %1688 = vmatprep.mubr.bf16.mxu0 0
    %1689 = vmatmul.mubr.bf16.gmra.mrb[0].mxu0 %v1654
    %v1690 = vpop.f32.mrb[0].mxu0
    %v1691 = vadd.f32 0.0, %v1690
    %v1692 = vpop.f32.mrb[0].mxu0
    %v1693 = vpop.f32.mrb[0].mxu0
    %v1694 = vpop.f32.mrb[0].mxu0
    %1695 = vdwg.mxu0
    %v1697 = vrot.slane %v1691, 4
    %v1699 = vadd.f32 %v1174, %v1697
    %v1700 = vxor.u32 %v1699, 2147483648
    %v1701 = vmul.f32 %v1700, 1.442695
    %v1702 = vpow.pop %v1701
    %v1703 = vadd.f32 %v1702, 1.0
    %v1704 = vrcp.pop %v1703
    %v1705 = vmul.f32 1.0, %v1704
    %v1706 = vtanh.pop %v1699
    %v1708 = vrot.slane %v1641, 6
    %v1710 = vmul.f32 %v1705, %v1708
    %1712 = vrot.lane.b32.xlu0 %v1706, 64
    %v1713 = vpop.permute.xlu0 %1712
    %v1715 = vmul.f32 %v1705, %v1713
    %1717 = vrot.lane.b32.xlu0 %v1715, 32
    %v1718 = vpop.permute.xlu0 %1717
    %v1720 = vadd.f32 %v1710, %v1718
    %v1721 = vtanh.pop %v1720
    %1723 = vrot.lane.b32.xlu0 %v1721, 64
    %v1724 = vpop.permute.xlu0 %1723
    %v1726 = vmul.f32 %v1705, %v1724
    %v1727 = vpack.c.bf16 %v1726, %v1726
    %v1729 = vrot.slane %v1727, 2
    %1730 = vrot.lane.b32.xlu0 %v1729, 32
    %v1731 = vpop.permute.xlu0 %1730
    %v1733 = vsel %vm117, %v1731, 0
    %1735 = vmatprep.subr.bf16.mxu0 0
    %1736 = vmatpush1.bf16.msra.mxu0 %v1189
    %1737 = vmatprep.subr.bf16.mxu0 0
    %1738 = vmatpush1.bf16.msra.mxu0 %v1190
    %1739 = vmatprep.subr.bf16.mxu0 0
    %1740 = vmatpush1.bf16.msra.mxu0 0
    %1741 = vmatprep.subr.bf16.mxu0 0
    %1742 = vmatpush1.bf16.msra.mxu0 0
    %1743 = vmatprep.subr.bf16.mxu0 0
    %1744 = vmatpush1.bf16.msra.mxu0 0
    %1745 = vmatprep.subr.bf16.mxu0 0
    %1746 = vmatpush1.bf16.msra.mxu0 0
    %1747 = vmatprep.subr.bf16.mxu0 0
    %1748 = vmatpush1.bf16.msra.mxu0 0
    %1749 = vmatprep.subr.bf16.mxu0 0
    %1750 = vmatpush1.bf16.msra.mxu0 0
    %1751 = vmatprep.subr.bf16.mxu0 0
    %1752 = vmatpush1.bf16.msra.mxu0 0
    %1753 = vmatprep.subr.bf16.mxu0 0
    %1754 = vmatpush1.bf16.msra.mxu0 0
    %1755 = vmatprep.subr.bf16.mxu0 0
    %1756 = vmatpush1.bf16.msra.mxu0 0
    %1757 = vmatprep.subr.bf16.mxu0 0
    %1758 = vmatpush1.bf16.msra.mxu0 0
    %1759 = vmatprep.subr.bf16.mxu0 0
    %1760 = vmatpush1.bf16.msra.mxu0 0
    %1761 = vmatprep.subr.bf16.mxu0 0
    %1762 = vmatpush1.bf16.msra.mxu0 0
    %1763 = vmatprep.subr.bf16.mxu0 0
    %1764 = vmatpush1.bf16.msra.mxu0 0
    %1765 = vmatprep.subr.bf16.mxu0 0
    %1766 = vmatpush1.bf16.msra.mxu0 0
    %1767 = vmatprep.mubr.bf16.mxu0 0
    %1768 = vmatmul.mubr.bf16.gmra.mrb[0].mxu0 %v1733
    %v1769 = vpop.f32.mrb[0].mxu0
    %v1770 = vadd.f32 0.0, %v1769
    %v1771 = vpop.f32.mrb[0].mxu0
    %v1772 = vpop.f32.mrb[0].mxu0
    %v1773 = vpop.f32.mrb[0].mxu0
    %1774 = vdwg.mxu0
    %v1776 = vrot.slane %v1770, 2
    %v1778 = vadd.f32 %v1174, %v1776
    %v1779 = vxor.u32 %v1778, 2147483648
    %v1780 = vmul.f32 %v1779, 1.442695
    %v1781 = vpow.pop %v1780
    %v1782 = vadd.f32 %v1781, 1.0
    %v1783 = vrcp.pop %v1782
    %v1784 = vmul.f32 1.0, %v1783
    %v1785 = vtanh.pop %v1778
    %v1787 = vrot.slane %v1720, 6
    %v1789 = vmul.f32 %v1784, %v1787
    %1791 = vrot.lane.b32.xlu0 %v1785, 64
    %v1792 = vpop.permute.xlu0 %1791
    %v1794 = vmul.f32 %v1784, %v1792
    %1796 = vrot.lane.b32.xlu0 %v1794, 32
    %v1797 = vpop.permute.xlu0 %1796
    %v1799 = vadd.f32 %v1789, %v1797
    %v1800 = vtanh.pop %v1799
    %1802 = vrot.lane.b32.xlu0 %v1800, 64
    %v1803 = vpop.permute.xlu0 %1802
    %v1805 = vmul.f32 %v1784, %v1803
    %v1806 = vpack.c.bf16 %v1805, %v1805
    %v1807 = vld [vmem:[%s7] sm:$0xf]
    %v1808 = vld [vmem:[%s7 + $0x4] sm:$0xf]
    %v1809 = vld [vmem:[%s7 + $0x8] sm:$0xf]
    %v1810 = vld [vmem:[%s7 + $0xc] sm:$0xf]
    %v1811 = vld [vmem:[%s8] sm:$0x1]
    %v1813 = vlaneseq
    %v1814 = vshrl.u32 %v1813, 7
    %v1815 = vsub.s32 0, %v1814
    %v1816 = vrot.slane %v1811, %v1815
    %v1819 = vrot.slane %v1806, 3
    %1820 = vrot.lane.b32.xlu0 %v1819, 32
    %v1821 = vpop.permute.xlu0 %1820
    %v1826 = vunpack.c.l.b16 %v1807
    %v1827 = vunpack.c.l.b16 %v1808
    %v1828 = vunpack.c.l.b16 %v1809
    %v1829 = vunpack.c.l.b16 %v1810
    %v1830 = vpack.c.b16 %v1827, %v1826
    %v1831 = vpack.c.b16 %v1829, %v1828
    %v1835 = vsel %vm117, %v1821, 0
    %1837 = vmatprep.subr.bf16.mxu0 0
    %1838 = vmatpush1.bf16.msra.mxu0 %v1830
    %1839 = vmatprep.subr.bf16.mxu0 0
    %1840 = vmatpush1.bf16.msra.mxu0 %v1831
    %1841 = vmatprep.subr.bf16.mxu0 0
    %1842 = vmatpush1.bf16.msra.mxu0 0
    %1843 = vmatprep.subr.bf16.mxu0 0
    %1844 = vmatpush1.bf16.msra.mxu0 0
    %1845 = vmatprep.subr.bf16.mxu0 0
    %1846 = vmatpush1.bf16.msra.mxu0 0
    %1847 = vmatprep.subr.bf16.mxu0 0
    %1848 = vmatpush1.bf16.msra.mxu0 0
    %1849 = vmatprep.subr.bf16.mxu0 0
    %1850 = vmatpush1.bf16.msra.mxu0 0
    %1851 = vmatprep.subr.bf16.mxu0 0
    %1852 = vmatpush1.bf16.msra.mxu0 0
    %1853 = vmatprep.subr.bf16.mxu0 0
    %1854 = vmatpush1.bf16.msra.mxu0 0
    %1855 = vmatprep.subr.bf16.mxu0 0
    %1856 = vmatpush1.bf16.msra.mxu0 0
    %1857 = vmatprep.subr.bf16.mxu0 0
    %1858 = vmatpush1.bf16.msra.mxu0 0
    %1859 = vmatprep.subr.bf16.mxu0 0
    %1860 = vmatpush1.bf16.msra.mxu0 0
    %1861 = vmatprep.subr.bf16.mxu0 0
    %1862 = vmatpush1.bf16.msra.mxu0 0
    %1863 = vmatprep.subr.bf16.mxu0 0
    %1864 = vmatpush1.bf16.msra.mxu0 0
    %1865 = vmatprep.subr.bf16.mxu0 0
    %1866 = vmatpush1.bf16.msra.mxu0 0
    %1867 = vmatprep.subr.bf16.mxu0 0
    %1868 = vmatpush1.bf16.msra.mxu0 0
    %1869 = vmatprep.mubr.bf16.mxu0 0
    %1870 = vmatmul.mubr.bf16.gmra.mrb[0].mxu0 %v1835
    %v1871 = vpop.f32.mrb[0].mxu0
    %v1872 = vadd.f32 %v1816, %v1871
    %v1873 = vpop.f32.mrb[0].mxu0
    %v1874 = vpop.f32.mrb[0].mxu0
    %v1875 = vpop.f32.mrb[0].mxu0
    %1876 = vdwg.mxu0
    %vm1877 = vcmask 25600
    %1878 = vst.msk [vmem:[#allocation3] sm:$0x3] %vm1877, %v1872
    // Predicated region
    $region38: #{lstm_model_forward.1} parent=1 // pred_check
      _
    $region39: #{lstm_model_forward.1} parent=1 // pred_check_branch
      %1880 = sbr.rel (0) target = $region41
    $region40: #{lstm_model_forward.1} parent=1 // pred_region
      %s1882 = ssub.s32 32, 32
      %1883 = vsyncadd [#allocation4], %s1882
      %s1885 = sshll.u32 [#allocation3], 4
      %s1886 = int_to_ptr.vmem [resolvable:$true] %s1885
      %1888 = dma.vmem_to_hbm [thread:$0]  %s1886, 32, %s9, [#allocation4]
    $region41: #{lstm_model_forward.1} parent=1 // pred_fallthru
      _
    // Predicated region
    $region42: #{lstm_model_forward.1} parent=1 // pred_check
      _
    $region43: #{lstm_model_forward.1} parent=1 // pred_check_branch
      %1890 = sbr.rel (0) target = $region45
    $region44: #{lstm_model_forward.1} parent=1 // pred_region
      %1891 = dma.done [#allocation4], 32
    $region45: #{lstm_model_forward.1} parent=1 // pred_fallthru
      _
    %1892 = vsyncpa [#allocation4], 1

</llo_original>
